<compile_context>
chip_gen: v7x
topology: tpu7x:2x2x1
jax: 0.10.0
libtpu: 0.0.40
codegen_flags: <defaults>
</compile_context>

<pallas_src>
import functools

import jax
import jax.numpy as jnp
import numpy as np
from jax import lax
from jax.experimental import pallas as pl
from jax.experimental.pallas import tpu as pltpu


def _round_up(x, m):
    return ((x + m - 1) // m) * m


def _pick_time_chunk(T, Bt, F_pad, H_pad, budget_bytes):
    """Largest time chunk whose streamed x slab (double-buffered) + gate scratch + residents fit
    the VMEM budget."""
    itemsize = 4  # f32
    per_step = Bt * (2 * F_pad + 4 * H_pad) * itemsize          # 2x x-slab + gate scratch
    resident = itemsize * (2 * F_pad * 4 * H_pad                # W_ih^T (default double-buffered)
                           + 2 * H_pad * 4 * H_pad              # W_hh^T
                           + 2 * 4 * H_pad                      # bias
                           + 4 * Bt * H_pad)                    # h/c scratch + output buffers
    avail = max(budget_bytes - resident, per_step)
    tc = max(1, min(T, avail // per_step, 512))
    if tc >= 8:
        tc -= tc % 8    # keep the steady-state chunk a multiple of the partial-unroll factor
    return int(tc)


def _fused_lstm_kernel(x_ref, wih_ref, whh_ref, bias_ref, h_out_ref,
                       g_scr, h_scr, c_scr, *, H_pad, Tc, rem, unroll):
    """One grid step = fused input projection + Tc (or `rem` on the last chunk) LSTM timesteps
    for one batch block.

    x_ref    : (Tc, Bt, F_pad)  f32   streamed time-major input chunk
    wih_ref  : (F_pad, 4*H_pad) f32   resident W_ih^T (gate-padded)
    whh_ref  : (H_pad, 4*H_pad) f32   resident W_hh^T (gate-padded)
    bias_ref : (1, 4*H_pad)     f32   resident b_ih + b_hh (gate-padded)
    h_out    : (Bt, H_pad)      f32   final hidden state (written on the last time chunk)
    g_scr    : (Tc, Bt, 4*H_pad) f32  per-chunk gate pre-activations
    h_scr/c_scr : (Bt, H_pad)   f32   recurrent state carried across time chunks
    """
    t_chunk = pl.program_id(1)
    n_t = pl.num_programs(1)

    @pl.when(t_chunk == 0)
    def _():
        h_scr[...] = jnp.zeros_like(h_scr)
        c_scr[...] = jnp.zeros_like(c_scr)

    # Fused input projection for the whole chunk: ONE big MXU matmul, no HBM gate intermediate.
    Tc_, Bt, F_pad = x_ref.shape
    x2d = x_ref[...].reshape(Tc_ * Bt, F_pad)
    g = jnp.dot(x2d, wih_ref[...], preferred_element_type=jnp.float32) + bias_ref[...]
    g_scr[...] = g.reshape(Tc_, Bt, 4 * H_pad)

    # Hoist the resident recurrent weights out of the (possibly unrolled) step loop.
    whh = whh_ref[...]

    def step(s, carry):
        h_prev, c_prev = carry
        # PyTorch gate order [i, f, g, o]; lane-aligned static slices (H_pad % 128 == 0).
        gates = g_scr[s] + jnp.dot(h_prev, whh, preferred_element_type=jnp.float32)
        i_g = jax.nn.sigmoid(gates[:, 0 * H_pad:1 * H_pad])
        f_g = jax.nn.sigmoid(gates[:, 1 * H_pad:2 * H_pad])
        g_g = jnp.tanh(gates[:, 2 * H_pad:3 * H_pad])
        o_g = jax.nn.sigmoid(gates[:, 3 * H_pad:4 * H_pad])
        c_new = f_g * c_prev + i_g * g_g
        h_new = o_g * jnp.tanh(c_new)
        return h_new, c_new

    def run_steps(n_steps):
        h, c = lax.fori_loop(0, n_steps, step, (h_scr[...], c_scr[...]), unroll=unroll)
        h_scr[...] = h
        c_scr[...] = c

    if rem == Tc:
        # T is a multiple of Tc: every chunk runs the unmasked steady-state loop.
        run_steps(Tc)
    else:
        # Steady state is unmasked; only the last chunk runs a (statically) shorter loop.
        @pl.when(t_chunk < n_t - 1)
        def _():
            run_steps(Tc)

        @pl.when(t_chunk == n_t - 1)
        def _():
            run_steps(rem)

    @pl.when(t_chunk == n_t - 1)
    def _():
        h_out_ref[...] = h_scr[...].astype(h_out_ref.dtype)


def story_encoder_forward(features, w_ih, w_hh, b_ih, b_hh, *,
                          vmem_budget_bytes=20 * 1024 * 1024):
    """features: (B, T, F).  Weights in PyTorch nn.LSTM layout:
       w_ih (4H, F), w_hh (4H, H), b_ih (4H,), b_hh (4H,).
       Returns dropout(h_n[-1]) == h_n[-1] in eval mode: (B, H) float32."""
    B, T, F = features.shape
    H = w_hh.shape[1]
    f32 = jnp.float32

    if T == 0:
        # Degenerate case: the recurrence never runs; the result is the zero initial state.
        return jnp.zeros((B, H), f32)

    H_pad = _round_up(H, 128)   # lane-aligned gates; 4*H_pad is a multiple of 256 (MXU friendly)
    F_pad = _round_up(F, 128)

    # Batch padding/blocking: full f32 sublanes; two batch blocks when B is large enough so v7x's
    # second TensorCore gets work (harmless single block elsewhere).
    B_pad = _round_up(B, 8)
    if B_pad >= 16:
        n_b = 2
        Bt = _round_up(-(-B_pad // n_b), 8)
        B_pad = Bt * n_b
    else:
        n_b, Bt = 1, B_pad

    Tc = _pick_time_chunk(T, Bt, F_pad, H_pad, vmem_budget_bytes)
    T_pad = _round_up(T, Tc)
    n_t = T_pad // Tc
    rem = T - (n_t - 1) * Tc            # static length of the last chunk (== Tc when T % Tc == 0)

    # Per-gate zero padding of the PyTorch-layout weights: gate k occupies columns
    # [k*H_pad, k*H_pad + H) of the padded (..., 4*H_pad) layout.  Padded gate columns get zero
    # weights + zero bias, so padded h/c lanes stay exactly 0 and never perturb real lanes.
    def pad_gate_rows(w):  # (4H, X) -> (4*H_pad, X)
        w4 = w.reshape(4, H, -1).astype(f32)
        return jnp.pad(w4, ((0, 0), (0, H_pad - H), (0, 0))).reshape(4 * H_pad, -1)

    wih_t = jnp.pad(pad_gate_rows(w_ih).T, ((0, F_pad - F), (0, 0)))    # (F_pad, 4*H_pad)
    whh_t = jnp.pad(pad_gate_rows(w_hh).T, ((0, H_pad - H), (0, 0)))    # (H_pad, 4*H_pad)
    bias = pad_gate_rows((b_ih + b_hh)[:, None])[:, 0][None, :]         # (1, 4*H_pad)

    # Time-major, zero-padded input (T_pad, B_pad, F_pad) -- the only streamed tensor; padding the
    # small x here is near-free compared with the old pad pass over a (T, B, 4H) gate tensor.
    x = jnp.transpose(features.astype(f32), (1, 0, 2))
    x = jnp.pad(x, ((0, T_pad - T), (0, B_pad - B), (0, F_pad - F)))

    # Full unroll for small live gate tensors; partial unroll=8 when B*4H is large (vreg pressure).
    unroll = True if Bt * 4 * H_pad * 4 <= 64 * 1024 else 8

    kernel = functools.partial(_fused_lstm_kernel, H_pad=H_pad, Tc=Tc, rem=rem, unroll=unroll)

    h_pad = pl.pallas_call(
        kernel,
        out_shape=jax.ShapeDtypeStruct((B_pad, H_pad), f32),
        grid_spec=pltpu.PrefetchScalarGridSpec(
            num_scalar_prefetch=0,
            grid=(n_b, n_t),                                             # (batch blocks, time chunks)
            in_specs=[
                pl.BlockSpec((Tc, Bt, F_pad), lambda b, t: (t, b, 0)),   # streamed x chunk
                pl.BlockSpec((F_pad, 4 * H_pad), lambda b, t: (0, 0)),   # W_ih^T resident
                pl.BlockSpec((H_pad, 4 * H_pad), lambda b, t: (0, 0)),   # W_hh^T resident
                pl.BlockSpec((1, 4 * H_pad), lambda b, t: (0, 0)),       # bias resident
            ],
            out_specs=pl.BlockSpec((Bt, H_pad), lambda b, t: (b, 0)),    # written on last chunk
            scratch_shapes=[
                pltpu.VMEM((Tc, Bt, 4 * H_pad), f32),  # per-chunk gate pre-activations
                pltpu.VMEM((Bt, H_pad), f32),          # h carry
                pltpu.VMEM((Bt, H_pad), f32),          # c carry
            ],
        ),
        compiler_params=pltpu.CompilerParams(
            dimension_semantics=("parallel", "arbitrary"),  # batch parallel, time sequential
            vmem_limit_bytes=32 * 1024 * 1024,
        ),
    )(x, wih_t, whh_t, bias)

    return h_pad[:B, :H]


def _reference_lstm(features, w_ih, w_hh, b_ih, b_hh):
    """Pure-JAX f32 reference of PyTorch's single-layer LSTM final hidden state h_n[-1]."""
    B, T, F = features.shape
    H = w_hh.shape[1]
    f32 = jnp.float32

    gates_x = jnp.einsum("btf,gf->tbg", features.astype(f32), w_ih.astype(f32),
                         preferred_element_type=f32) + (b_ih + b_hh).astype(f32)
    whh_t = w_hh.T.astype(f32)

    def step(carry, g_t):
        h, c = carry
        gates = g_t + jnp.dot(h, whh_t, preferred_element_type=f32)
        i = jax.nn.sigmoid(gates[:, 0 * H:1 * H])
        f = jax.nn.sigmoid(gates[:, 1 * H:2 * H])
        g = jnp.tanh(gates[:, 2 * H:3 * H])
        o = jax.nn.sigmoid(gates[:, 3 * H:4 * H])
        c = f * c + i * g
        h = o * jnp.tanh(c)
        return (h, c), None

    init = (jnp.zeros((B, H), f32), jnp.zeros((B, H), f32))
    (h, _), _ = lax.scan(step, init, gates_x)
    return h


if __name__ == "__main__":
    key = jax.random.PRNGKey(0)
    B, T, F, H = 2, 8, 16, 32

    k0, k1, k2, k3, k4 = jax.random.split(key, 5)
    bound = 1.0 / np.sqrt(H)  # PyTorch nn.LSTM default init scale
    features = jax.random.normal(k0, (B, T, F), dtype=jnp.float32)
    w_ih = jax.random.uniform(k1, (4 * H, F), minval=-bound, maxval=bound, dtype=jnp.float32)
    w_hh = jax.random.uniform(k2, (4 * H, H), minval=-bound, maxval=bound, dtype=jnp.float32)
    b_ih = jax.random.uniform(k3, (4 * H,), minval=-bound, maxval=bound, dtype=jnp.float32)
    b_hh = jax.random.uniform(k4, (4 * H,), minval=-bound, maxval=bound, dtype=jnp.float32)

    out = jax.block_until_ready(story_encoder_forward(features, w_ih, w_hh, b_ih, b_hh))
    assert out.shape == (B, H)

    # Check against the f32 PyTorch-semantics reference.  Tolerance covers TPU default matmul
    # precision (bf16 operand rounding inside the MXU); exact-f32 backends match much tighter.
    ref = jax.block_until_ready(_reference_lstm(features, w_ih, w_hh, b_ih, b_hh))
    np.testing.assert_allclose(np.asarray(out), np.asarray(ref), rtol=2e-2, atol=2e-2)

    print("KERNEL_OK")
</pallas_src>

<mosaic_0001>
module attributes {stable_mosaic.version = 11 : i64} {
  func.func @_fused_lstm_kernel(%arg0: i32, %arg1: i32, %arg2: memref<8x8x128xf32, #tpu.memory_space<vmem>>, %arg3: memref<128x512xf32, #tpu.memory_space<vmem>>, %arg4: memref<128x512xf32, #tpu.memory_space<vmem>>, %arg5: memref<1x512xf32, #tpu.memory_space<vmem>>, %arg6: memref<8x128xf32, #tpu.memory_space<vmem>>, %arg7: memref<8x8x512xf32, #tpu.memory_space<vmem>>, %arg8: memref<8x128xf32, #tpu.memory_space<vmem>>, %arg9: memref<8x128xf32, #tpu.memory_space<vmem>>) attributes {dimension_semantics = [#tpu.dimension_semantics<parallel>, #tpu.dimension_semantics<arbitrary>], iteration_bounds = array<i64: 1, 1>, scalar_prefetch = 0 : i64, scratch_operands = 3 : i64, tpu.core_type = #tpu.core_type<tc>, window_params = [{transform_indices = @transform_0, window_bounds = array<i64: 8, 8, 128>}, {pipeline_mode = #tpu.pipeline_mode<synchronous>, transform_indices = @transform_1, window_bounds = array<i64: 128, 512>}, {pipeline_mode = #tpu.pipeline_mode<synchronous>, transform_indices = @transform_2, window_bounds = array<i64: 128, 512>}, {pipeline_mode = #tpu.pipeline_mode<synchronous>, transform_indices = @transform_3, window_bounds = array<i64: 1, 512>}, {transform_indices = @transform_4, window_bounds = array<i64: 8, 128>}]} {
    %c0_i32 = arith.constant 0 : i32
    %0 = arith.cmpi eq, %arg1, %c0_i32 : i32
    %1 = arith.extui %0 : i1 to i32
    %c0_i32_0 = arith.constant 0 : i32
    %2 = arith.cmpi ne, %1, %c0_i32_0 : i32
    scf.if %2 {
      %cst_71 = arith.constant 0.000000e+00 : f32
      %260 = vector.broadcast %cst_71 : f32 to vector<8x128xf32>
      %c0_72 = arith.constant 0 : index
      %c0_73 = arith.constant 0 : index
      %261 = vector.load %arg8[%c0_72, %c0_73] : memref<8x128xf32, #tpu.memory_space<vmem>>, vector<8x128xf32>
      tpu.vector_store %arg8[%c0_72, %c0_73], %260 {strides = array<i32>} : memref<8x128xf32, #tpu.memory_space<vmem>>, vector<8x128xf32>,
      %cst_74 = arith.constant 0.000000e+00 : f32
      %262 = vector.broadcast %cst_74 : f32 to vector<8x128xf32>
      %c0_75 = arith.constant 0 : index
      %c0_76 = arith.constant 0 : index
      %263 = vector.load %arg9[%c0_75, %c0_76] : memref<8x128xf32, #tpu.memory_space<vmem>>, vector<8x128xf32>
      tpu.vector_store %arg9[%c0_75, %c0_76], %262 {strides = array<i32>} : memref<8x128xf32, #tpu.memory_space<vmem>>, vector<8x128xf32>,
    } else {
    }
    %c0 = arith.constant 0 : index
    %c0_1 = arith.constant 0 : index
    %c0_2 = arith.constant 0 : index
    %3 = vector.load %arg2[%c0, %c0_1, %c0_2] : memref<8x8x128xf32, #tpu.memory_space<vmem>>, vector<8x8x128xf32>
    %4 = vector.shape_cast %3 : vector<8x8x128xf32> to vector<64x128xf32>
    %c0_3 = arith.constant 0 : index
    %c0_4 = arith.constant 0 : index
    %5 = vector.load %arg3[%c0_3, %c0_4] : memref<128x512xf32, #tpu.memory_space<vmem>>, vector<128x512xf32>
    %cst = arith.constant dense<0.000000e+00> : vector<64x512xf32>
    %6 = tpu.matmul %4, %5, %cst {dimension_numbers = #tpu.dot_dimension_numbers<[1], [0], [0], [1], [0, 0, 1, 1], [], []>} : vector<64x128xf32>, vector<128x512xf32>, vector<64x512xf32> -> vector<64x512xf32>
    %c0_5 = arith.constant 0 : index
    %c0_6 = arith.constant 0 : index
    %7 = vector.load %arg5[%c0_5, %c0_6] : memref<1x512xf32, #tpu.memory_space<vmem>>, vector<1x512xf32>
    %8 = vector.broadcast %7 : vector<1x512xf32> to vector<64x512xf32>
    %9 = arith.addf %6, %8 : vector<64x512xf32>
    %10 = vector.shape_cast %9 : vector<64x512xf32> to vector<8x8x512xf32>
    %c0_7 = arith.constant 0 : index
    %c0_8 = arith.constant 0 : index
    %c0_9 = arith.constant 0 : index
    %11 = vector.load %arg7[%c0_7, %c0_8, %c0_9] : memref<8x8x512xf32, #tpu.memory_space<vmem>>, vector<8x8x512xf32>
    tpu.vector_store %arg7[%c0_7, %c0_8, %c0_9], %10 {strides = array<i32>} : memref<8x8x512xf32, #tpu.memory_space<vmem>>, vector<8x8x512xf32>,
    %c0_10 = arith.constant 0 : index
    %c0_11 = arith.constant 0 : index
    %12 = vector.load %arg4[%c0_10, %c0_11] : memref<128x512xf32, #tpu.memory_space<vmem>>, vector<128x512xf32>
    %c0_12 = arith.constant 0 : index
    %c0_13 = arith.constant 0 : index
    %13 = vector.load %arg8[%c0_12, %c0_13] : memref<8x128xf32, #tpu.memory_space<vmem>>, vector<8x128xf32>
    %c0_14 = arith.constant 0 : index
    %c0_15 = arith.constant 0 : index
    %14 = vector.load %arg9[%c0_14, %c0_15] : memref<8x128xf32, #tpu.memory_space<vmem>>, vector<8x128xf32>
    %c0_i32_16 = arith.constant 0 : i32
    %15 = arith.index_cast %c0_i32_16 : i32 to index
    %c0_17 = arith.constant 0 : index
    %c0_18 = arith.constant 0 : index
    %16 = vector.load %arg7[%15, %c0_17, %c0_18] : memref<8x8x512xf32, #tpu.memory_space<vmem>>, vector<1x8x512xf32>
    %17 = vector.shape_cast %16 : vector<1x8x512xf32> to vector<8x512xf32>
    %cst_19 = arith.constant dense<0.000000e+00> : vector<8x512xf32>
    %18 = tpu.matmul %13, %12, %cst_19 {dimension_numbers = #tpu.dot_dimension_numbers<[1], [0], [0], [1], [0, 0, 1, 1], [], []>} : vector<8x128xf32>, vector<128x512xf32>, vector<8x512xf32> -> vector<8x512xf32>
    %19 = arith.addf %17, %18 : vector<8x512xf32>
    %20 = vector.extract_strided_slice %19 {offsets = [0, 0], sizes = [8, 128], strides = [1, 1]} : vector<8x512xf32> to vector<8x128xf32>
    %21 = arith.negf %20 : vector<8x128xf32>
    %22 = math.exp %21 : vector<8x128xf32>
    %cst_20 = arith.constant 1.000000e+00 : f32
    %23 = vector.broadcast %cst_20 : f32 to vector<8x128xf32>
    %24 = arith.addf %23, %22 : vector<8x128xf32>
    %25 = arith.divf %23, %24 : vector<8x128xf32>
    %26 = vector.extract_strided_slice %19 {offsets = [0, 128], sizes = [8, 128], strides = [1, 1]} : vector<8x512xf32> to vector<8x128xf32>
    %27 = arith.negf %26 : vector<8x128xf32>
    %28 = math.exp %27 : vector<8x128xf32>
    %cst_21 = arith.constant 1.000000e+00 : f32
    %29 = vector.broadcast %cst_21 : f32 to vector<8x128xf32>
    %30 = arith.addf %29, %28 : vector<8x128xf32>
    %31 = arith.divf %29, %30 : vector<8x128xf32>
    %32 = vector.extract_strided_slice %19 {offsets = [0, 256], sizes = [8, 128], strides = [1, 1]} : vector<8x512xf32> to vector<8x128xf32>
    %33 = math.tanh %32 : vector<8x128xf32>
    %34 = vector.extract_strided_slice %19 {offsets = [0, 384], sizes = [8, 128], strides = [1, 1]} : vector<8x512xf32> to vector<8x128xf32>
    %35 = arith.negf %34 : vector<8x128xf32>
    %36 = math.exp %35 : vector<8x128xf32>
    %cst_22 = arith.constant 1.000000e+00 : f32
    %37 = vector.broadcast %cst_22 : f32 to vector<8x128xf32>
    %38 = arith.addf %37, %36 : vector<8x128xf32>
    %39 = arith.divf %37, %38 : vector<8x128xf32>
    %40 = arith.mulf %31, %14 : vector<8x128xf32>
    %41 = arith.mulf %25, %33 : vector<8x128xf32>
    %42 = arith.addf %40, %41 : vector<8x128xf32>
    %43 = math.tanh %42 : vector<8x128xf32>
    %44 = arith.mulf %39, %43 : vector<8x128xf32>
    %c1_i32 = arith.constant 1 : i32
    %45 = arith.index_cast %c1_i32 : i32 to index
    %c0_23 = arith.constant 0 : index
    %c0_24 = arith.constant 0 : index
    %46 = vector.load %arg7[%45, %c0_23, %c0_24] : memref<8x8x512xf32, #tpu.memory_space<vmem>>, vector<1x8x512xf32>
    %47 = vector.shape_cast %46 : vector<1x8x512xf32> to vector<8x512xf32>
    %cst_25 = arith.constant dense<0.000000e+00> : vector<8x512xf32>
    %48 = tpu.matmul %44, %12, %cst_25 {dimension_numbers = #tpu.dot_dimension_numbers<[1], [0], [0], [1], [0, 0, 1, 1], [], []>} : vector<8x128xf32>, vector<128x512xf32>, vector<8x512xf32> -> vector<8x512xf32>
    %49 = arith.addf %47, %48 : vector<8x512xf32>
    %50 = vector.extract_strided_slice %49 {offsets = [0, 0], sizes = [8, 128], strides = [1, 1]} : vector<8x512xf32> to vector<8x128xf32>
    %51 = arith.negf %50 : vector<8x128xf32>
    %52 = math.exp %51 : vector<8x128xf32>
    %cst_26 = arith.constant 1.000000e+00 : f32
    %53 = vector.broadcast %cst_26 : f32 to vector<8x128xf32>
    %54 = arith.addf %53, %52 : vector<8x128xf32>
    %55 = arith.divf %53, %54 : vector<8x128xf32>
    %56 = vector.extract_strided_slice %49 {offsets = [0, 128], sizes = [8, 128], strides = [1, 1]} : vector<8x512xf32> to vector<8x128xf32>
    %57 = arith.negf %56 : vector<8x128xf32>
    %58 = math.exp %57 : vector<8x128xf32>
    %cst_27 = arith.constant 1.000000e+00 : f32
    %59 = vector.broadcast %cst_27 : f32 to vector<8x128xf32>
    %60 = arith.addf %59, %58 : vector<8x128xf32>
    %61 = arith.divf %59, %60 : vector<8x128xf32>
    %62 = vector.extract_strided_slice %49 {offsets = [0, 256], sizes = [8, 128], strides = [1, 1]} : vector<8x512xf32> to vector<8x128xf32>
    %63 = math.tanh %62 : vector<8x128xf32>
    %64 = vector.extract_strided_slice %49 {offsets = [0, 384], sizes = [8, 128], strides = [1, 1]} : vector<8x512xf32> to vector<8x128xf32>
    %65 = arith.negf %64 : vector<8x128xf32>
    %66 = math.exp %65 : vector<8x128xf32>
    %cst_28 = arith.constant 1.000000e+00 : f32
    %67 = vector.broadcast %cst_28 : f32 to vector<8x128xf32>
    %68 = arith.addf %67, %66 : vector<8x128xf32>
    %69 = arith.divf %67, %68 : vector<8x128xf32>
    %70 = arith.mulf %61, %42 : vector<8x128xf32>
    %71 = arith.mulf %55, %63 : vector<8x128xf32>
    %72 = arith.addf %70, %71 : vector<8x128xf32>
    %73 = math.tanh %72 : vector<8x128xf32>
    %74 = arith.mulf %69, %73 : vector<8x128xf32>
    %c2_i32 = arith.constant 2 : i32
    %75 = arith.index_cast %c2_i32 : i32 to index
    %c0_29 = arith.constant 0 : index
    %c0_30 = arith.constant 0 : index
    %76 = vector.load %arg7[%75, %c0_29, %c0_30] : memref<8x8x512xf32, #tpu.memory_space<vmem>>, vector<1x8x512xf32>
    %77 = vector.shape_cast %76 : vector<1x8x512xf32> to vector<8x512xf32>
    %cst_31 = arith.constant dense<0.000000e+00> : vector<8x512xf32>
    %78 = tpu.matmul %74, %12, %cst_31 {dimension_numbers = #tpu.dot_dimension_numbers<[1], [0], [0], [1], [0, 0, 1, 1], [], []>} : vector<8x128xf32>, vector<128x512xf32>, vector<8x512xf32> -> vector<8x512xf32>
    %79 = arith.addf %77, %78 : vector<8x512xf32>
    %80 = vector.extract_strided_slice %79 {offsets = [0, 0], sizes = [8, 128], strides = [1, 1]} : vector<8x512xf32> to vector<8x128xf32>
    %81 = arith.negf %80 : vector<8x128xf32>
    %82 = math.exp %81 : vector<8x128xf32>
    %cst_32 = arith.constant 1.000000e+00 : f32
    %83 = vector.broadcast %cst_32 : f32 to vector<8x128xf32>
    %84 = arith.addf %83, %82 : vector<8x128xf32>
    %85 = arith.divf %83, %84 : vector<8x128xf32>
    %86 = vector.extract_strided_slice %79 {offsets = [0, 128], sizes = [8, 128], strides = [1, 1]} : vector<8x512xf32> to vector<8x128xf32>
    %87 = arith.negf %86 : vector<8x128xf32>
    %88 = math.exp %87 : vector<8x128xf32>
    %cst_33 = arith.constant 1.000000e+00 : f32
    %89 = vector.broadcast %cst_33 : f32 to vector<8x128xf32>
    %90 = arith.addf %89, %88 : vector<8x128xf32>
    %91 = arith.divf %89, %90 : vector<8x128xf32>
    %92 = vector.extract_strided_slice %79 {offsets = [0, 256], sizes = [8, 128], strides = [1, 1]} : vector<8x512xf32> to vector<8x128xf32>
    %93 = math.tanh %92 : vector<8x128xf32>
    %94 = vector.extract_strided_slice %79 {offsets = [0, 384], sizes = [8, 128], strides = [1, 1]} : vector<8x512xf32> to vector<8x128xf32>
    %95 = arith.negf %94 : vector<8x128xf32>
    %96 = math.exp %95 : vector<8x128xf32>
    %cst_34 = arith.constant 1.000000e+00 : f32
    %97 = vector.broadcast %cst_34 : f32 to vector<8x128xf32>
    %98 = arith.addf %97, %96 : vector<8x128xf32>
    %99 = arith.divf %97, %98 : vector<8x128xf32>
    %100 = arith.mulf %91, %72 : vector<8x128xf32>
    %101 = arith.mulf %85, %93 : vector<8x128xf32>
    %102 = arith.addf %100, %101 : vector<8x128xf32>
    %103 = math.tanh %102 : vector<8x128xf32>
    %104 = arith.mulf %99, %103 : vector<8x128xf32>
    %c3_i32 = arith.constant 3 : i32
    %105 = arith.index_cast %c3_i32 : i32 to index
    %c0_35 = arith.constant 0 : index
    %c0_36 = arith.constant 0 : index
    %106 = vector.load %arg7[%105, %c0_35, %c0_36] : memref<8x8x512xf32, #tpu.memory_space<vmem>>, vector<1x8x512xf32>
    %107 = vector.shape_cast %106 : vector<1x8x512xf32> to vector<8x512xf32>
    %cst_37 = arith.constant dense<0.000000e+00> : vector<8x512xf32>
    %108 = tpu.matmul %104, %12, %cst_37 {dimension_numbers = #tpu.dot_dimension_numbers<[1], [0], [0], [1], [0, 0, 1, 1], [], []>} : vector<8x128xf32>, vector<128x512xf32>, vector<8x512xf32> -> vector<8x512xf32>
    %109 = arith.addf %107, %108 : vector<8x512xf32>
    %110 = vector.extract_strided_slice %109 {offsets = [0, 0], sizes = [8, 128], strides = [1, 1]} : vector<8x512xf32> to vector<8x128xf32>
    %111 = arith.negf %110 : vector<8x128xf32>
    %112 = math.exp %111 : vector<8x128xf32>
    %cst_38 = arith.constant 1.000000e+00 : f32
    %113 = vector.broadcast %cst_38 : f32 to vector<8x128xf32>
    %114 = arith.addf %113, %112 : vector<8x128xf32>
    %115 = arith.divf %113, %114 : vector<8x128xf32>
    %116 = vector.extract_strided_slice %109 {offsets = [0, 128], sizes = [8, 128], strides = [1, 1]} : vector<8x512xf32> to vector<8x128xf32>
    %117 = arith.negf %116 : vector<8x128xf32>
    %118 = math.exp %117 : vector<8x128xf32>
    %cst_39 = arith.constant 1.000000e+00 : f32
    %119 = vector.broadcast %cst_39 : f32 to vector<8x128xf32>
    %120 = arith.addf %119, %118 : vector<8x128xf32>
    %121 = arith.divf %119, %120 : vector<8x128xf32>
    %122 = vector.extract_strided_slice %109 {offsets = [0, 256], sizes = [8, 128], strides = [1, 1]} : vector<8x512xf32> to vector<8x128xf32>
    %123 = math.tanh %122 : vector<8x128xf32>
    %124 = vector.extract_strided_slice %109 {offsets = [0, 384], sizes = [8, 128], strides = [1, 1]} : vector<8x512xf32> to vector<8x128xf32>
    %125 = arith.negf %124 : vector<8x128xf32>
    %126 = math.exp %125 : vector<8x128xf32>
    %cst_40 = arith.constant 1.000000e+00 : f32
    %127 = vector.broadcast %cst_40 : f32 to vector<8x128xf32>
    %128 = arith.addf %127, %126 : vector<8x128xf32>
    %129 = arith.divf %127, %128 : vector<8x128xf32>
    %130 = arith.mulf %121, %102 : vector<8x128xf32>
    %131 = arith.mulf %115, %123 : vector<8x128xf32>
    %132 = arith.addf %130, %131 : vector<8x128xf32>
    %133 = math.tanh %132 : vector<8x128xf32>
    %134 = arith.mulf %129, %133 : vector<8x128xf32>
    %c4_i32 = arith.constant 4 : i32
    %135 = arith.index_cast %c4_i32 : i32 to index
    %c0_41 = arith.constant 0 : index
    %c0_42 = arith.constant 0 : index
    %136 = vector.load %arg7[%135, %c0_41, %c0_42] : memref<8x8x512xf32, #tpu.memory_space<vmem>>, vector<1x8x512xf32>
    %137 = vector.shape_cast %136 : vector<1x8x512xf32> to vector<8x512xf32>
    %cst_43 = arith.constant dense<0.000000e+00> : vector<8x512xf32>
    %138 = tpu.matmul %134, %12, %cst_43 {dimension_numbers = #tpu.dot_dimension_numbers<[1], [0], [0], [1], [0, 0, 1, 1], [], []>} : vector<8x128xf32>, vector<128x512xf32>, vector<8x512xf32> -> vector<8x512xf32>
    %139 = arith.addf %137, %138 : vector<8x512xf32>
    %140 = vector.extract_strided_slice %139 {offsets = [0, 0], sizes = [8, 128], strides = [1, 1]} : vector<8x512xf32> to vector<8x128xf32>
    %141 = arith.negf %140 : vector<8x128xf32>
    %142 = math.exp %141 : vector<8x128xf32>
    %cst_44 = arith.constant 1.000000e+00 : f32
    %143 = vector.broadcast %cst_44 : f32 to vector<8x128xf32>
    %144 = arith.addf %143, %142 : vector<8x128xf32>
    %145 = arith.divf %143, %144 : vector<8x128xf32>
    %146 = vector.extract_strided_slice %139 {offsets = [0, 128], sizes = [8, 128], strides = [1, 1]} : vector<8x512xf32> to vector<8x128xf32>
    %147 = arith.negf %146 : vector<8x128xf32>
    %148 = math.exp %147 : vector<8x128xf32>
    %cst_45 = arith.constant 1.000000e+00 : f32
    %149 = vector.broadcast %cst_45 : f32 to vector<8x128xf32>
    %150 = arith.addf %149, %148 : vector<8x128xf32>
    %151 = arith.divf %149, %150 : vector<8x128xf32>
    %152 = vector.extract_strided_slice %139 {offsets = [0, 256], sizes = [8, 128], strides = [1, 1]} : vector<8x512xf32> to vector<8x128xf32>
    %153 = math.tanh %152 : vector<8x128xf32>
    %154 = vector.extract_strided_slice %139 {offsets = [0, 384], sizes = [8, 128], strides = [1, 1]} : vector<8x512xf32> to vector<8x128xf32>
    %155 = arith.negf %154 : vector<8x128xf32>
    %156 = math.exp %155 : vector<8x128xf32>
    %cst_46 = arith.constant 1.000000e+00 : f32
    %157 = vector.broadcast %cst_46 : f32 to vector<8x128xf32>
    %158 = arith.addf %157, %156 : vector<8x128xf32>
    %159 = arith.divf %157, %158 : vector<8x128xf32>
    %160 = arith.mulf %151, %132 : vector<8x128xf32>
    %161 = arith.mulf %145, %153 : vector<8x128xf32>
    %162 = arith.addf %160, %161 : vector<8x128xf32>
    %163 = math.tanh %162 : vector<8x128xf32>
    %164 = arith.mulf %159, %163 : vector<8x128xf32>
    %c5_i32 = arith.constant 5 : i32
    %165 = arith.index_cast %c5_i32 : i32 to index
    %c0_47 = arith.constant 0 : index
    %c0_48 = arith.constant 0 : index
    %166 = vector.load %arg7[%165, %c0_47, %c0_48] : memref<8x8x512xf32, #tpu.memory_space<vmem>>, vector<1x8x512xf32>
    %167 = vector.shape_cast %166 : vector<1x8x512xf32> to vector<8x512xf32>
    %cst_49 = arith.constant dense<0.000000e+00> : vector<8x512xf32>
    %168 = tpu.matmul %164, %12, %cst_49 {dimension_numbers = #tpu.dot_dimension_numbers<[1], [0], [0], [1], [0, 0, 1, 1], [], []>} : vector<8x128xf32>, vector<128x512xf32>, vector<8x512xf32> -> vector<8x512xf32>
    %169 = arith.addf %167, %168 : vector<8x512xf32>
    %170 = vector.extract_strided_slice %169 {offsets = [0, 0], sizes = [8, 128], strides = [1, 1]} : vector<8x512xf32> to vector<8x128xf32>
    %171 = arith.negf %170 : vector<8x128xf32>
    %172 = math.exp %171 : vector<8x128xf32>
    %cst_50 = arith.constant 1.000000e+00 : f32
    %173 = vector.broadcast %cst_50 : f32 to vector<8x128xf32>
    %174 = arith.addf %173, %172 : vector<8x128xf32>
    %175 = arith.divf %173, %174 : vector<8x128xf32>
    %176 = vector.extract_strided_slice %169 {offsets = [0, 128], sizes = [8, 128], strides = [1, 1]} : vector<8x512xf32> to vector<8x128xf32>
    %177 = arith.negf %176 : vector<8x128xf32>
    %178 = math.exp %177 : vector<8x128xf32>
    %cst_51 = arith.constant 1.000000e+00 : f32
    %179 = vector.broadcast %cst_51 : f32 to vector<8x128xf32>
    %180 = arith.addf %179, %178 : vector<8x128xf32>
    %181 = arith.divf %179, %180 : vector<8x128xf32>
    %182 = vector.extract_strided_slice %169 {offsets = [0, 256], sizes = [8, 128], strides = [1, 1]} : vector<8x512xf32> to vector<8x128xf32>
    %183 = math.tanh %182 : vector<8x128xf32>
    %184 = vector.extract_strided_slice %169 {offsets = [0, 384], sizes = [8, 128], strides = [1, 1]} : vector<8x512xf32> to vector<8x128xf32>
    %185 = arith.negf %184 : vector<8x128xf32>
    %186 = math.exp %185 : vector<8x128xf32>
    %cst_52 = arith.constant 1.000000e+00 : f32
    %187 = vector.broadcast %cst_52 : f32 to vector<8x128xf32>
    %188 = arith.addf %187, %186 : vector<8x128xf32>
    %189 = arith.divf %187, %188 : vector<8x128xf32>
    %190 = arith.mulf %181, %162 : vector<8x128xf32>
    %191 = arith.mulf %175, %183 : vector<8x128xf32>
    %192 = arith.addf %190, %191 : vector<8x128xf32>
    %193 = math.tanh %192 : vector<8x128xf32>
    %194 = arith.mulf %189, %193 : vector<8x128xf32>
    %c6_i32 = arith.constant 6 : i32
    %195 = arith.index_cast %c6_i32 : i32 to index
    %c0_53 = arith.constant 0 : index
    %c0_54 = arith.constant 0 : index
    %196 = vector.load %arg7[%195, %c0_53, %c0_54] : memref<8x8x512xf32, #tpu.memory_space<vmem>>, vector<1x8x512xf32>
    %197 = vector.shape_cast %196 : vector<1x8x512xf32> to vector<8x512xf32>
    %cst_55 = arith.constant dense<0.000000e+00> : vector<8x512xf32>
    %198 = tpu.matmul %194, %12, %cst_55 {dimension_numbers = #tpu.dot_dimension_numbers<[1], [0], [0], [1], [0, 0, 1, 1], [], []>} : vector<8x128xf32>, vector<128x512xf32>, vector<8x512xf32> -> vector<8x512xf32>
    %199 = arith.addf %197, %198 : vector<8x512xf32>
    %200 = vector.extract_strided_slice %199 {offsets = [0, 0], sizes = [8, 128], strides = [1, 1]} : vector<8x512xf32> to vector<8x128xf32>
    %201 = arith.negf %200 : vector<8x128xf32>
    %202 = math.exp %201 : vector<8x128xf32>
    %cst_56 = arith.constant 1.000000e+00 : f32
    %203 = vector.broadcast %cst_56 : f32 to vector<8x128xf32>
    %204 = arith.addf %203, %202 : vector<8x128xf32>
    %205 = arith.divf %203, %204 : vector<8x128xf32>
    %206 = vector.extract_strided_slice %199 {offsets = [0, 128], sizes = [8, 128], strides = [1, 1]} : vector<8x512xf32> to vector<8x128xf32>
    %207 = arith.negf %206 : vector<8x128xf32>
    %208 = math.exp %207 : vector<8x128xf32>
    %cst_57 = arith.constant 1.000000e+00 : f32
    %209 = vector.broadcast %cst_57 : f32 to vector<8x128xf32>
    %210 = arith.addf %209, %208 : vector<8x128xf32>
    %211 = arith.divf %209, %210 : vector<8x128xf32>
    %212 = vector.extract_strided_slice %199 {offsets = [0, 256], sizes = [8, 128], strides = [1, 1]} : vector<8x512xf32> to vector<8x128xf32>
    %213 = math.tanh %212 : vector<8x128xf32>
    %214 = vector.extract_strided_slice %199 {offsets = [0, 384], sizes = [8, 128], strides = [1, 1]} : vector<8x512xf32> to vector<8x128xf32>
    %215 = arith.negf %214 : vector<8x128xf32>
    %216 = math.exp %215 : vector<8x128xf32>
    %cst_58 = arith.constant 1.000000e+00 : f32
    %217 = vector.broadcast %cst_58 : f32 to vector<8x128xf32>
    %218 = arith.addf %217, %216 : vector<8x128xf32>
    %219 = arith.divf %217, %218 : vector<8x128xf32>
    %220 = arith.mulf %211, %192 : vector<8x128xf32>
    %221 = arith.mulf %205, %213 : vector<8x128xf32>
    %222 = arith.addf %220, %221 : vector<8x128xf32>
    %223 = math.tanh %222 : vector<8x128xf32>
    %224 = arith.mulf %219, %223 : vector<8x128xf32>
    %c7_i32 = arith.constant 7 : i32
    %225 = arith.index_cast %c7_i32 : i32 to index
    %c0_59 = arith.constant 0 : index
    %c0_60 = arith.constant 0 : index
    %226 = vector.load %arg7[%225, %c0_59, %c0_60] : memref<8x8x512xf32, #tpu.memory_space<vmem>>, vector<1x8x512xf32>
    %227 = vector.shape_cast %226 : vector<1x8x512xf32> to vector<8x512xf32>
    %cst_61 = arith.constant dense<0.000000e+00> : vector<8x512xf32>
    %228 = tpu.matmul %224, %12, %cst_61 {dimension_numbers = #tpu.dot_dimension_numbers<[1], [0], [0], [1], [0, 0, 1, 1], [], []>} : vector<8x128xf32>, vector<128x512xf32>, vector<8x512xf32> -> vector<8x512xf32>
    %229 = arith.addf %227, %228 : vector<8x512xf32>
    %230 = vector.extract_strided_slice %229 {offsets = [0, 0], sizes = [8, 128], strides = [1, 1]} : vector<8x512xf32> to vector<8x128xf32>
    %231 = arith.negf %230 : vector<8x128xf32>
    %232 = math.exp %231 : vector<8x128xf32>
    %cst_62 = arith.constant 1.000000e+00 : f32
    %233 = vector.broadcast %cst_62 : f32 to vector<8x128xf32>
    %234 = arith.addf %233, %232 : vector<8x128xf32>
    %235 = arith.divf %233, %234 : vector<8x128xf32>
    %236 = vector.extract_strided_slice %229 {offsets = [0, 128], sizes = [8, 128], strides = [1, 1]} : vector<8x512xf32> to vector<8x128xf32>
    %237 = arith.negf %236 : vector<8x128xf32>
    %238 = math.exp %237 : vector<8x128xf32>
    %cst_63 = arith.constant 1.000000e+00 : f32
    %239 = vector.broadcast %cst_63 : f32 to vector<8x128xf32>
    %240 = arith.addf %239, %238 : vector<8x128xf32>
    %241 = arith.divf %239, %240 : vector<8x128xf32>
    %242 = vector.extract_strided_slice %229 {offsets = [0, 256], sizes = [8, 128], strides = [1, 1]} : vector<8x512xf32> to vector<8x128xf32>
    %243 = math.tanh %242 : vector<8x128xf32>
    %244 = vector.extract_strided_slice %229 {offsets = [0, 384], sizes = [8, 128], strides = [1, 1]} : vector<8x512xf32> to vector<8x128xf32>
    %245 = arith.negf %244 : vector<8x128xf32>
    %246 = math.exp %245 : vector<8x128xf32>
    %cst_64 = arith.constant 1.000000e+00 : f32
    %247 = vector.broadcast %cst_64 : f32 to vector<8x128xf32>
    %248 = arith.addf %247, %246 : vector<8x128xf32>
    %249 = arith.divf %247, %248 : vector<8x128xf32>
    %250 = arith.mulf %241, %222 : vector<8x128xf32>
    %251 = arith.mulf %235, %243 : vector<8x128xf32>
    %252 = arith.addf %250, %251 : vector<8x128xf32>
    %253 = math.tanh %252 : vector<8x128xf32>
    %254 = arith.mulf %249, %253 : vector<8x128xf32>
    %c8_i32 = arith.constant 8 : i32
    %c0_65 = arith.constant 0 : index
    %c0_66 = arith.constant 0 : index
    %255 = vector.load %arg8[%c0_65, %c0_66] : memref<8x128xf32, #tpu.memory_space<vmem>>, vector<8x128xf32>
    tpu.vector_store %arg8[%c0_65, %c0_66], %254 {strides = array<i32>} : memref<8x128xf32, #tpu.memory_space<vmem>>, vector<8x128xf32>,
    %c0_67 = arith.constant 0 : index
    %c0_68 = arith.constant 0 : index
    %256 = vector.load %arg9[%c0_67, %c0_68] : memref<8x128xf32, #tpu.memory_space<vmem>>, vector<8x128xf32>
    tpu.vector_store %arg9[%c0_67, %c0_68], %252 {strides = array<i32>} : memref<8x128xf32, #tpu.memory_space<vmem>>, vector<8x128xf32>,
    %c0_i32_69 = arith.constant 0 : i32
    %257 = arith.cmpi eq, %arg1, %c0_i32_69 : i32
    %258 = arith.extui %257 : i1 to i32
    %c0_i32_70 = arith.constant 0 : i32
    %259 = arith.cmpi ne, %258, %c0_i32_70 : i32
    scf.if %259 {
      %c0_71 = arith.constant 0 : index
      %c0_72 = arith.constant 0 : index
      %260 = vector.load %arg8[%c0_71, %c0_72] : memref<8x128xf32, #tpu.memory_space<vmem>>, vector<8x128xf32>
      %c0_73 = arith.constant 0 : index
      %c0_74 = arith.constant 0 : index
      %261 = vector.load %arg6[%c0_73, %c0_74] : memref<8x128xf32, #tpu.memory_space<vmem>>, vector<8x128xf32>
      tpu.vector_store %arg6[%c0_73, %c0_74], %260 {strides = array<i32>} : memref<8x128xf32, #tpu.memory_space<vmem>>, vector<8x128xf32>,
    } else {
    }
    return
  }
  func.func @transform_0(%arg0: i32, %arg1: i32) -> (i32, i32, i32) {
    %c0_i32 = arith.constant 0 : i32
    %c0_i32_0 = arith.constant 0 : i32
    return %arg1, %arg0, %c0_i32 : i32, i32, i32
  }
  func.func @transform_1(%arg0: i32, %arg1: i32) -> (i32, i32) {
    %c0_i32 = arith.constant 0 : i32
    %c0_i32_0 = arith.constant 0 : i32
    %c0_i32_1 = arith.constant 0 : i32
    return %c0_i32, %c0_i32_0 : i32, i32
  }
  func.func @transform_2(%arg0: i32, %arg1: i32) -> (i32, i32) {
    %c0_i32 = arith.constant 0 : i32
    %c0_i32_0 = arith.constant 0 : i32
    %c0_i32_1 = arith.constant 0 : i32
    return %c0_i32, %c0_i32_0 : i32, i32
  }
  func.func @transform_3(%arg0: i32, %arg1: i32) -> (i32, i32) {
    %c0_i32 = arith.constant 0 : i32
    %c0_i32_0 = arith.constant 0 : i32
    %c0_i32_1 = arith.constant 0 : i32
    return %c0_i32, %c0_i32_0 : i32, i32
  }
  func.func @transform_4(%arg0: i32, %arg1: i32) -> (i32, i32) {
    %c0_i32 = arith.constant 0 : i32
    %c0_i32_0 = arith.constant 0 : i32
    return %arg0, %c0_i32 : i32, i32
  }
}

</mosaic_0001>

<llo_original>
// kernel: tpu_custom_call.1
$region0: #{tpu_custom_call.1}
  #allocation0 [shape = 'u32[]', space=smem, size = 0x4, offset = 0x4, fixed_abs, tag = 'smem constant byte address 0x4 - core index']
  #allocation1 [shape = 'u32[144,128]{1,0:T(1,128)}', space=vmem, size = 0x12000, scoped, tag = 'internal scratch']
  #allocation2 [shape = 'f32[8,8,512]{2,1,0:T(8,128)}', space=vmem, size = 0x20000, scoped, tag = 'scratch operand']
  #allocation3 [shape = 'f32[8,128]{1,0:T(8,128)}', space=vmem, size = 0x1000, scoped, tag = 'scratch operand']
  #allocation4 [shape = 'f32[8,128]{1,0:T(8,128)}', space=vmem, size = 0x1000, scoped, tag = 'scratch operand']
  %s0 = inlined_call_operand.hbm [shape: f32[8,8,128], index: 0, kind: input, shape index: {}]
  %s1 = inlined_call_operand.hbm [shape: f32[128,512], index: 1, kind: input, shape index: {}]
  %s2 = inlined_call_operand.hbm [shape: f32[128,512], index: 2, kind: input, shape index: {}]
  %s3 = inlined_call_operand.vmem [shape: f32[1,512], index: 3, kind: input, shape index: {}]
  %s4 = inlined_call_operand.hbm [shape: f32[8,128], index: 4, kind: output, shape index: {}]
  %s5 = sld [smem:[#allocation0]]
  $region46: #{tpu_custom_call.1} parent=0
    _
  %s7 = ssub.s32 1, %s5
  %s8 = scalar_select 0, %s7, %s5
  $region1: #{tpu_custom_call.1} parent=0
    #allocation5 [shape = 'u8[32768]{0}', space=vmem, size = 0x8000, scoped, tag = 'input window, operand 0, single buffered']
    #allocation6 [shape = 's32[1]{0}', space=sflag, size = 0x4, scoped, tag = 'scoped memory for tpu_custom_call.1']
    #allocation7 [shape = 's32[1]{0}', space=sflag, size = 0x4, scoped, tag = 'scoped memory for tpu_custom_call.1']
    #allocation8 [shape = 'u8[262144]{0}', space=vmem, size = 0x40000, scoped, tag = 'input window, operand 1, single buffered']
    #allocation9 [shape = 's32[1]{0}', space=sflag, size = 0x4, scoped, tag = 'scoped memory for tpu_custom_call.1']
    #allocation10 [shape = 'u8[262144]{0}', space=vmem, size = 0x40000, scoped, tag = 'input window, operand 2, single buffered']
    #allocation11 [shape = 'u8[4096]{0}', space=vmem, size = 0x1000, scoped, tag = 'output window, operand 0, single buffered']
    %9 = vsyncpa [#allocation6], 0
    %10 = vsyncpa [#allocation9], 0
    %11 = vsyncpa [#allocation7], 0
    // Predicated region
    $region2: #{tpu_custom_call.1} parent=1 // pred_check
      _
    $region3: #{tpu_custom_call.1} parent=1 // pred_check_branch
      %13 = sbr.rel (0) target = $region5
    $region4: #{tpu_custom_call.1} parent=1 // pred_region
      %s15 = ssub.s32 1024, 1024
      %16 = vsyncadd [#allocation6], %s15
      %s17 = sshll.u32 [#allocation5], 4
      %s18 = int_to_ptr.vmem [resolvable:$true] %s17
      %23 = dma.hbm_to_vmem [thread:$0]  %s0, 1024, %s18, [#allocation6], 128, 128, 8
    $region5: #{tpu_custom_call.1} parent=1 // pred_fallthru
      _
    // Predicated region
    $region6: #{tpu_custom_call.1} parent=1 // pred_check
      _
    $region7: #{tpu_custom_call.1} parent=1 // pred_check_branch
      %25 = sbr.rel (0) target = $region9
    $region8: #{tpu_custom_call.1} parent=1 // pred_region
      %s27 = ssub.s32 8192, 8192
      %28 = vsyncadd [#allocation9], %s27
      %s29 = sshll.u32 [#allocation8], 4
      %s30 = int_to_ptr.vmem [resolvable:$true] %s29
      %35 = dma.hbm_to_vmem [thread:$0]  %s1, 8192, %s30, [#allocation9], 512, 512, 32
    $region9: #{tpu_custom_call.1} parent=1 // pred_fallthru
      _
    // Predicated region
    $region10: #{tpu_custom_call.1} parent=1 // pred_check
      _
    $region11: #{tpu_custom_call.1} parent=1 // pred_check_branch
      %37 = sbr.rel (0) target = $region13
    $region12: #{tpu_custom_call.1} parent=1 // pred_region
      %s39 = ssub.s32 8192, 8192
      %40 = vsyncadd [#allocation9], %s39
      %s41 = sshll.u32 [#allocation10], 4
      %s42 = int_to_ptr.vmem [resolvable:$true] %s41
      %47 = dma.hbm_to_vmem [thread:$0]  %s2, 8192, %s42, [#allocation9], 512, 512, 32
    $region13: #{tpu_custom_call.1} parent=1 // pred_fallthru
      _
    // Predicated region
    $region14: #{tpu_custom_call.1} parent=1 // pred_check
      _
    $region15: #{tpu_custom_call.1} parent=1 // pred_check_branch
      %49 = sbr.rel (0) target = $region17
    $region16: #{tpu_custom_call.1} parent=1 // pred_region
      _
    $region17: #{tpu_custom_call.1} parent=1 // pred_fallthru
      _
    // Predicated region
    $region18: #{tpu_custom_call.1} parent=1 // pred_check
      _
    $region19: #{tpu_custom_call.1} parent=1 // pred_check_branch
      %51 = sbr.rel (0) target = $region21
    $region20: #{tpu_custom_call.1} parent=1 // pred_region
      %52 = dma.done [#allocation6], 1024
    $region21: #{tpu_custom_call.1} parent=1 // pred_fallthru
      _
    // Predicated region
    $region22: #{tpu_custom_call.1} parent=1 // pred_check
      _
    $region23: #{tpu_custom_call.1} parent=1 // pred_check_branch
      %54 = sbr.rel (0) target = $region25
    $region24: #{tpu_custom_call.1} parent=1 // pred_region
      %55 = dma.done [#allocation9], 8192
    $region25: #{tpu_custom_call.1} parent=1 // pred_fallthru
      _
    // Predicated region
    $region26: #{tpu_custom_call.1} parent=1 // pred_check
      _
    $region27: #{tpu_custom_call.1} parent=1 // pred_check_branch
      %57 = sbr.rel (0) target = $region29
    $region28: #{tpu_custom_call.1} parent=1 // pred_region
      %58 = dma.done [#allocation9], 8192
    $region29: #{tpu_custom_call.1} parent=1 // pred_fallthru
      _
    %p59 = scmp.eq.s32.totalorder 0, 0
    // Predicated region
    $region30: #{tpu_custom_call.1} parent=1 // pred_check
      %p60 = pneg %p59
    $region31: #{tpu_custom_call.1} parent=1 // pred_check_branch
      %62 = sbr.rel (%p60) target = $region33
    $region32: #{tpu_custom_call.1} parent=1 // pred_region
      %63 = vst [vmem:[#allocation3] sm:$0xff] 0.0
      %64 = vst [vmem:[#allocation4] sm:$0xff] 0.0
    $region33: #{tpu_custom_call.1} parent=1 // pred_fallthru
      _
    %v65 = vld [vmem:[#allocation5] sm:$0xff]
    %v66 = vld [vmem:[#allocation5 + $0x8] sm:$0xff]
    %v67 = vld [vmem:[#allocation5 + $0x10] sm:$0xff]
    %v68 = vld [vmem:[#allocation5 + $0x18] sm:$0xff]
    %v69 = vld [vmem:[#allocation5 + $0x20] sm:$0xff]
    %v70 = vld [vmem:[#allocation5 + $0x28] sm:$0xff]
    %v71 = vld [vmem:[#allocation5 + $0x30] sm:$0xff]
    %v72 = vld [vmem:[#allocation5 + $0x38] sm:$0xff]
    %v73 = vld [vmem:[#allocation8] sm:$0xff]
    %v74 = vld [vmem:[#allocation8 + $0x8] sm:$0xff]
    %v75 = vld [vmem:[#allocation8 + $0x10] sm:$0xff]
    %v76 = vld [vmem:[#allocation8 + $0x18] sm:$0xff]
    %v77 = vld [vmem:[#allocation8 + $0x20] sm:$0xff]
    %v78 = vld [vmem:[#allocation8 + $0x28] sm:$0xff]
    %v79 = vld [vmem:[#allocation8 + $0x30] sm:$0xff]
    %v80 = vld [vmem:[#allocation8 + $0x38] sm:$0xff]
    %v81 = vld [vmem:[#allocation8 + $0x40] sm:$0xff]
    %v82 = vld [vmem:[#allocation8 + $0x48] sm:$0xff]
    %v83 = vld [vmem:[#allocation8 + $0x50] sm:$0xff]
    %v84 = vld [vmem:[#allocation8 + $0x58] sm:$0xff]
    %v85 = vld [vmem:[#allocation8 + $0x60] sm:$0xff]
    %v86 = vld [vmem:[#allocation8 + $0x68] sm:$0xff]
    %v87 = vld [vmem:[#allocation8 + $0x70] sm:$0xff]
    %v88 = vld [vmem:[#allocation8 + $0x78] sm:$0xff]
    %v89 = vld [vmem:[#allocation8 + $0x80] sm:$0xff]
    %v90 = vld [vmem:[#allocation8 + $0x88] sm:$0xff]
    %v91 = vld [vmem:[#allocation8 + $0x90] sm:$0xff]
    %v92 = vld [vmem:[#allocation8 + $0x98] sm:$0xff]
    %v93 = vld [vmem:[#allocation8 + $0xa0] sm:$0xff]
    %v94 = vld [vmem:[#allocation8 + $0xa8] sm:$0xff]
    %v95 = vld [vmem:[#allocation8 + $0xb0] sm:$0xff]
    %v96 = vld [vmem:[#allocation8 + $0xb8] sm:$0xff]
    %v97 = vld [vmem:[#allocation8 + $0xc0] sm:$0xff]
    %v98 = vld [vmem:[#allocation8 + $0xc8] sm:$0xff]
    %v99 = vld [vmem:[#allocation8 + $0xd0] sm:$0xff]
    %v100 = vld [vmem:[#allocation8 + $0xd8] sm:$0xff]
    %v101 = vld [vmem:[#allocation8 + $0xe0] sm:$0xff]
    %v102 = vld [vmem:[#allocation8 + $0xe8] sm:$0xff]
    %v103 = vld [vmem:[#allocation8 + $0xf0] sm:$0xff]
    %v104 = vld [vmem:[#allocation8 + $0xf8] sm:$0xff]
    %v105 = vld [vmem:[#allocation8 + $0x100] sm:$0xff]
    %v106 = vld [vmem:[#allocation8 + $0x108] sm:$0xff]
    %v107 = vld [vmem:[#allocation8 + $0x110] sm:$0xff]
    %v108 = vld [vmem:[#allocation8 + $0x118] sm:$0xff]
    %v109 = vld [vmem:[#allocation8 + $0x120] sm:$0xff]
    %v110 = vld [vmem:[#allocation8 + $0x128] sm:$0xff]
    %v111 = vld [vmem:[#allocation8 + $0x130] sm:$0xff]
    %v112 = vld [vmem:[#allocation8 + $0x138] sm:$0xff]
    %v113 = vld [vmem:[#allocation8 + $0x140] sm:$0xff]
    %v114 = vld [vmem:[#allocation8 + $0x148] sm:$0xff]
    %v115 = vld [vmem:[#allocation8 + $0x150] sm:$0xff]
    %v116 = vld [vmem:[#allocation8 + $0x158] sm:$0xff]
    %v117 = vld [vmem:[#allocation8 + $0x160] sm:$0xff]
    %v118 = vld [vmem:[#allocation8 + $0x168] sm:$0xff]
    %v119 = vld [vmem:[#allocation8 + $0x170] sm:$0xff]
    %v120 = vld [vmem:[#allocation8 + $0x178] sm:$0xff]
    %v121 = vld [vmem:[#allocation8 + $0x180] sm:$0xff]
    %v122 = vld [vmem:[#allocation8 + $0x188] sm:$0xff]
    %v123 = vld [vmem:[#allocation8 + $0x190] sm:$0xff]
    %v124 = vld [vmem:[#allocation8 + $0x198] sm:$0xff]
    %v125 = vld [vmem:[#allocation8 + $0x1a0] sm:$0xff]
    %v126 = vld [vmem:[#allocation8 + $0x1a8] sm:$0xff]
    %v127 = vld [vmem:[#allocation8 + $0x1b0] sm:$0xff]
    %v128 = vld [vmem:[#allocation8 + $0x1b8] sm:$0xff]
    %v129 = vld [vmem:[#allocation8 + $0x1c0] sm:$0xff]
    %v130 = vld [vmem:[#allocation8 + $0x1c8] sm:$0xff]
    %v131 = vld [vmem:[#allocation8 + $0x1d0] sm:$0xff]
    %v132 = vld [vmem:[#allocation8 + $0x1d8] sm:$0xff]
    %v133 = vld [vmem:[#allocation8 + $0x1e0] sm:$0xff]
    %v134 = vld [vmem:[#allocation8 + $0x1e8] sm:$0xff]
    %v135 = vld [vmem:[#allocation8 + $0x1f0] sm:$0xff]
    %v136 = vld [vmem:[#allocation8 + $0x1f8] sm:$0xff]
    %v137 = vld [vmem:[%s3] sm:$0xf]
    %v139 = vlaneseq
    %v140 = vshrl.u32 %v139, 7
    %v141 = vsub.s32 0, %v140
    %v142 = vrot.slane %v137, %v141
    %v143 = vlaneseq
    %v144 = vshrl.u32 %v143, 7
    %v145 = vsub.s32 1, %v144
    %v146 = vrot.slane %v137, %v145
    %v147 = vlaneseq
    %v148 = vshrl.u32 %v147, 7
    %v149 = vsub.s32 2, %v148
    %v150 = vrot.slane %v137, %v149
    %v151 = vlaneseq
    %v152 = vshrl.u32 %v151, 7
    %v153 = vsub.s32 3, %v152
    %v154 = vrot.slane %v137, %v153
    %159 = vmatprep.subr.mxu0 %v74
    %160 = vmatpush1.msra.mxu0 %v73
    %161 = vmatprep.subr.mxu0 %v78
    %162 = vmatpush1.msra.mxu0 %v77
    %163 = vmatprep.subr.mxu0 %v82
    %164 = vmatpush1.msra.mxu0 %v81
    %165 = vmatprep.subr.mxu0 %v86
    %166 = vmatpush1.msra.mxu0 %v85
    %167 = vmatprep.subr.mxu0 %v90
    %168 = vmatpush1.msra.mxu0 %v89
    %169 = vmatprep.subr.mxu0 %v94
    %170 = vmatpush1.msra.mxu0 %v93
    %171 = vmatprep.subr.mxu0 %v98
    %172 = vmatpush1.msra.mxu0 %v97
    %173 = vmatprep.subr.mxu0 %v102
    %174 = vmatpush1.msra.mxu0 %v101
    %175 = vmatprep.subr.mxu0 %v106
    %176 = vmatpush1.msra.mxu0 %v105
    %177 = vmatprep.subr.mxu0 %v110
    %178 = vmatpush1.msra.mxu0 %v109
    %179 = vmatprep.subr.mxu0 %v114
    %180 = vmatpush1.msra.mxu0 %v113
    %181 = vmatprep.subr.mxu0 %v118
    %182 = vmatpush1.msra.mxu0 %v117
    %183 = vmatprep.subr.mxu0 %v122
    %184 = vmatpush1.msra.mxu0 %v121
    %185 = vmatprep.subr.mxu0 %v126
    %186 = vmatpush1.msra.mxu0 %v125
    %187 = vmatprep.subr.mxu0 %v130
    %188 = vmatpush1.msra.mxu0 %v129
    %189 = vmatprep.subr.mxu0 %v134
    %190 = vmatpush1.msra.mxu0 %v133
    %191 = vmatprep.subr.mxu0 0.0
    %192 = vmatpush1.msra.mxu0 0.0
    %193 = vmatprep.subr.mxu0 0.0
    %194 = vmatpush1.msra.mxu0 0.0
    %195 = vmatprep.subr.mxu0 0.0
    %196 = vmatpush1.msra.mxu0 0.0
    %197 = vmatprep.subr.mxu0 0.0
    %198 = vmatpush1.msra.mxu0 0.0
    %199 = vmatprep.subr.mxu0 0.0
    %200 = vmatpush1.msra.mxu0 0.0
    %201 = vmatprep.subr.mxu0 0.0
    %202 = vmatpush1.msra.mxu0 0.0
    %203 = vmatprep.subr.mxu0 0.0
    %204 = vmatpush1.msra.mxu0 0.0
    %205 = vmatprep.subr.mxu0 0.0
    %206 = vmatpush1.msra.mxu0 0.0
    %207 = vmatprep.subr.mxu0 0.0
    %208 = vmatpush1.msra.mxu0 0.0
    %209 = vmatprep.subr.mxu0 0.0
    %210 = vmatpush1.msra.mxu0 0.0
    %211 = vmatprep.subr.mxu0 0.0
    %212 = vmatpush1.msra.mxu0 0.0
    %213 = vmatprep.subr.mxu0 0.0
    %214 = vmatpush1.msra.mxu0 0.0
    %215 = vmatprep.subr.mxu0 0.0
    %216 = vmatpush1.msra.mxu0 0.0
    %217 = vmatprep.subr.mxu0 0.0
    %218 = vmatpush1.msra.mxu0 0.0
    %219 = vmatprep.subr.mxu0 0.0
    %220 = vmatpush1.msra.mxu0 0.0
    %221 = vmatprep.subr.mxu0 0.0
    %222 = vmatpush1.msra.mxu0 0.0
    %223 = vmatprep.mubr.f32.mxu0 0.0
    %224 = vmatmul.mubr.f32.gmra.mrb[0].mxu0 %v65
    %v225 = vpop.f32.mrb[0].mxu0
    %v226 = vadd.f32 %v142, %v225
    %v227 = vpop.f32.mrb[0].mxu0
    %v228 = vadd.f32 %v146, %v227
    %229 = vmatprep.mubr.f32.mxu0 0.0
    %230 = vmatmul.mubr.f32.gmra.mrb[0].mxu0 %v66
    %v231 = vpop.f32.mrb[0].mxu0
    %v232 = vadd.f32 %v142, %v231
    %v233 = vpop.f32.mrb[0].mxu0
    %v234 = vadd.f32 %v146, %v233
    %235 = vmatprep.mubr.f32.mxu0 0.0
    %236 = vmatmul.mubr.f32.gmra.mrb[0].mxu0 %v67
    %v237 = vpop.f32.mrb[0].mxu0
    %v238 = vadd.f32 %v142, %v237
    %v239 = vpop.f32.mrb[0].mxu0
    %v240 = vadd.f32 %v146, %v239
    %241 = vmatprep.mubr.f32.mxu0 0.0
    %242 = vmatmul.mubr.f32.gmra.mrb[0].mxu0 %v68
    %v243 = vpop.f32.mrb[0].mxu0
    %v244 = vadd.f32 %v142, %v243
    %v245 = vpop.f32.mrb[0].mxu0
    %v246 = vadd.f32 %v146, %v245
    %247 = vmatprep.mubr.f32.mxu0 0.0
    %248 = vmatmul.mubr.f32.gmra.mrb[0].mxu0 %v69
    %v249 = vpop.f32.mrb[0].mxu0
    %v250 = vadd.f32 %v142, %v249
    %v251 = vpop.f32.mrb[0].mxu0
    %v252 = vadd.f32 %v146, %v251
    %253 = vmatprep.mubr.f32.mxu0 0.0
    %254 = vmatmul.mubr.f32.gmra.mrb[0].mxu0 %v70
    %v255 = vpop.f32.mrb[0].mxu0
    %v256 = vadd.f32 %v142, %v255
    %v257 = vpop.f32.mrb[0].mxu0
    %v258 = vadd.f32 %v146, %v257
    %259 = vmatprep.mubr.f32.mxu0 0.0
    %260 = vmatmul.mubr.f32.gmra.mrb[0].mxu0 %v71
    %v261 = vpop.f32.mrb[0].mxu0
    %v262 = vadd.f32 %v142, %v261
    %v263 = vpop.f32.mrb[0].mxu0
    %v264 = vadd.f32 %v146, %v263
    %265 = vmatprep.mubr.f32.mxu0 0.0
    %266 = vmatmul.mubr.f32.gmra.mrb[0].mxu0 %v72
    %v267 = vpop.f32.mrb[0].mxu0
    %v268 = vadd.f32 %v142, %v267
    %v269 = vpop.f32.mrb[0].mxu0
    %v270 = vadd.f32 %v146, %v269
    %271 = vdwg.mxu0
    %272 = vmatprep.subr.mxu0 %v76
    %273 = vmatpush1.msra.mxu0 %v75
    %274 = vmatprep.subr.mxu0 %v80
    %275 = vmatpush1.msra.mxu0 %v79
    %276 = vmatprep.subr.mxu0 %v84
    %277 = vmatpush1.msra.mxu0 %v83
    %278 = vmatprep.subr.mxu0 %v88
    %279 = vmatpush1.msra.mxu0 %v87
    %280 = vmatprep.subr.mxu0 %v92
    %281 = vmatpush1.msra.mxu0 %v91
    %282 = vmatprep.subr.mxu0 %v96
    %283 = vmatpush1.msra.mxu0 %v95
    %284 = vmatprep.subr.mxu0 %v100
    %285 = vmatpush1.msra.mxu0 %v99
    %286 = vmatprep.subr.mxu0 %v104
    %287 = vmatpush1.msra.mxu0 %v103
    %288 = vmatprep.subr.mxu0 %v108
    %289 = vmatpush1.msra.mxu0 %v107
    %290 = vmatprep.subr.mxu0 %v112
    %291 = vmatpush1.msra.mxu0 %v111
    %292 = vmatprep.subr.mxu0 %v116
    %293 = vmatpush1.msra.mxu0 %v115
    %294 = vmatprep.subr.mxu0 %v120
    %295 = vmatpush1.msra.mxu0 %v119
    %296 = vmatprep.subr.mxu0 %v124
    %297 = vmatpush1.msra.mxu0 %v123
    %298 = vmatprep.subr.mxu0 %v128
    %299 = vmatpush1.msra.mxu0 %v127
    %300 = vmatprep.subr.mxu0 %v132
    %301 = vmatpush1.msra.mxu0 %v131
    %302 = vmatprep.subr.mxu0 %v136
    %303 = vmatpush1.msra.mxu0 %v135
    %304 = vmatprep.subr.mxu0 0.0
    %305 = vmatpush1.msra.mxu0 0.0
    %306 = vmatprep.subr.mxu0 0.0
    %307 = vmatpush1.msra.mxu0 0.0
    %308 = vmatprep.subr.mxu0 0.0
    %309 = vmatpush1.msra.mxu0 0.0
    %310 = vmatprep.subr.mxu0 0.0
    %311 = vmatpush1.msra.mxu0 0.0
    %312 = vmatprep.subr.mxu0 0.0
    %313 = vmatpush1.msra.mxu0 0.0
    %314 = vmatprep.subr.mxu0 0.0
    %315 = vmatpush1.msra.mxu0 0.0
    %316 = vmatprep.subr.mxu0 0.0
    %317 = vmatpush1.msra.mxu0 0.0
    %318 = vmatprep.subr.mxu0 0.0
    %319 = vmatpush1.msra.mxu0 0.0
    %320 = vmatprep.subr.mxu0 0.0
    %321 = vmatpush1.msra.mxu0 0.0
    %322 = vmatprep.subr.mxu0 0.0
    %323 = vmatpush1.msra.mxu0 0.0
    %324 = vmatprep.subr.mxu0 0.0
    %325 = vmatpush1.msra.mxu0 0.0
    %326 = vmatprep.subr.mxu0 0.0
    %327 = vmatpush1.msra.mxu0 0.0
    %328 = vmatprep.subr.mxu0 0.0
    %329 = vmatpush1.msra.mxu0 0.0
    %330 = vmatprep.subr.mxu0 0.0
    %331 = vmatpush1.msra.mxu0 0.0
    %332 = vmatprep.subr.mxu0 0.0
    %333 = vmatpush1.msra.mxu0 0.0
    %334 = vmatprep.subr.mxu0 0.0
    %335 = vmatpush1.msra.mxu0 0.0
    %336 = vmatprep.mubr.f32.mxu0 0.0
    %337 = vmatmul.mubr.f32.gmra.mrb[0].mxu0 %v65
    %v338 = vpop.f32.mrb[0].mxu0
    %v339 = vadd.f32 %v150, %v338
    %v340 = vpop.f32.mrb[0].mxu0
    %v341 = vadd.f32 %v154, %v340
    %342 = vmatprep.mubr.f32.mxu0 0.0
    %343 = vmatmul.mubr.f32.gmra.mrb[0].mxu0 %v66
    %v344 = vpop.f32.mrb[0].mxu0
    %v345 = vadd.f32 %v150, %v344
    %v346 = vpop.f32.mrb[0].mxu0
    %v347 = vadd.f32 %v154, %v346
    %348 = vmatprep.mubr.f32.mxu0 0.0
    %349 = vmatmul.mubr.f32.gmra.mrb[0].mxu0 %v67
    %v350 = vpop.f32.mrb[0].mxu0
    %v351 = vadd.f32 %v150, %v350
    %v352 = vpop.f32.mrb[0].mxu0
    %v353 = vadd.f32 %v154, %v352
    %354 = vmatprep.mubr.f32.mxu0 0.0
    %355 = vmatmul.mubr.f32.gmra.mrb[0].mxu0 %v68
    %v356 = vpop.f32.mrb[0].mxu0
    %v357 = vadd.f32 %v150, %v356
    %v358 = vpop.f32.mrb[0].mxu0
    %v359 = vadd.f32 %v154, %v358
    %360 = vmatprep.mubr.f32.mxu0 0.0
    %361 = vmatmul.mubr.f32.gmra.mrb[0].mxu0 %v69
    %v362 = vpop.f32.mrb[0].mxu0
    %v363 = vadd.f32 %v150, %v362
    %v364 = vpop.f32.mrb[0].mxu0
    %v365 = vadd.f32 %v154, %v364
    %366 = vmatprep.mubr.f32.mxu0 0.0
    %367 = vmatmul.mubr.f32.gmra.mrb[0].mxu0 %v70
    %v368 = vpop.f32.mrb[0].mxu0
    %v369 = vadd.f32 %v150, %v368
    %v370 = vpop.f32.mrb[0].mxu0
    %v371 = vadd.f32 %v154, %v370
    %372 = vmatprep.mubr.f32.mxu0 0.0
    %373 = vmatmul.mubr.f32.gmra.mrb[0].mxu0 %v71
    %v374 = vpop.f32.mrb[0].mxu0
    %v375 = vadd.f32 %v150, %v374
    %v376 = vpop.f32.mrb[0].mxu0
    %v377 = vadd.f32 %v154, %v376
    %378 = vmatprep.mubr.f32.mxu0 0.0
    %379 = vmatmul.mubr.f32.gmra.mrb[0].mxu0 %v72
    %v380 = vpop.f32.mrb[0].mxu0
    %v381 = vadd.f32 %v150, %v380
    %v382 = vpop.f32.mrb[0].mxu0
    %v383 = vadd.f32 %v154, %v382
    %384 = vdwg.mxu0
    %385 = vst [vmem:[#allocation2] sm:$0xff] %v226
    %386 = vst [vmem:[#allocation2 + $0x8] sm:$0xff] %v228
    %387 = vst [vmem:[#allocation2 + $0x10] sm:$0xff] %v339
    %388 = vst [vmem:[#allocation2 + $0x18] sm:$0xff] %v341
    %389 = vst [vmem:[#allocation2 + $0x20] sm:$0xff] %v232
    %390 = vst [vmem:[#allocation2 + $0x28] sm:$0xff] %v234
    %391 = vst [vmem:[#allocation2 + $0x30] sm:$0xff] %v345
    %392 = vst [vmem:[#allocation2 + $0x38] sm:$0xff] %v347
    %393 = vst [vmem:[#allocation2 + $0x40] sm:$0xff] %v238
    %394 = vst [vmem:[#allocation2 + $0x48] sm:$0xff] %v240
    %395 = vst [vmem:[#allocation2 + $0x50] sm:$0xff] %v351
    %396 = vst [vmem:[#allocation2 + $0x58] sm:$0xff] %v353
    %397 = vst [vmem:[#allocation2 + $0x60] sm:$0xff] %v244
    %398 = vst [vmem:[#allocation2 + $0x68] sm:$0xff] %v246
    %399 = vst [vmem:[#allocation2 + $0x70] sm:$0xff] %v357
    %400 = vst [vmem:[#allocation2 + $0x78] sm:$0xff] %v359
    %401 = vst [vmem:[#allocation2 + $0x80] sm:$0xff] %v250
    %402 = vst [vmem:[#allocation2 + $0x88] sm:$0xff] %v252
    %403 = vst [vmem:[#allocation2 + $0x90] sm:$0xff] %v363
    %404 = vst [vmem:[#allocation2 + $0x98] sm:$0xff] %v365
    %405 = vst [vmem:[#allocation2 + $0xa0] sm:$0xff] %v256
    %406 = vst [vmem:[#allocation2 + $0xa8] sm:$0xff] %v258
    %407 = vst [vmem:[#allocation2 + $0xb0] sm:$0xff] %v369
    %408 = vst [vmem:[#allocation2 + $0xb8] sm:$0xff] %v371
    %409 = vst [vmem:[#allocation2 + $0xc0] sm:$0xff] %v262
    %410 = vst [vmem:[#allocation2 + $0xc8] sm:$0xff] %v264
    %411 = vst [vmem:[#allocation2 + $0xd0] sm:$0xff] %v375
    %412 = vst [vmem:[#allocation2 + $0xd8] sm:$0xff] %v377
    %413 = vst [vmem:[#allocation2 + $0xe0] sm:$0xff] %v268
    %414 = vst [vmem:[#allocation2 + $0xe8] sm:$0xff] %v270
    %415 = vst [vmem:[#allocation2 + $0xf0] sm:$0xff] %v381
    %416 = vst [vmem:[#allocation2 + $0xf8] sm:$0xff] %v383
    %v417 = vld [vmem:[#allocation10] sm:$0xff]
    %v418 = vld [vmem:[#allocation10 + $0x8] sm:$0xff]
    %v419 = vld [vmem:[#allocation10 + $0x10] sm:$0xff]
    %v420 = vld [vmem:[#allocation10 + $0x18] sm:$0xff]
    %v421 = vld [vmem:[#allocation10 + $0x20] sm:$0xff]
    %v422 = vld [vmem:[#allocation10 + $0x28] sm:$0xff]
    %v423 = vld [vmem:[#allocation10 + $0x30] sm:$0xff]
    %v424 = vld [vmem:[#allocation10 + $0x38] sm:$0xff]
    %v425 = vld [vmem:[#allocation10 + $0x40] sm:$0xff]
    %v426 = vld [vmem:[#allocation10 + $0x48] sm:$0xff]
    %v427 = vld [vmem:[#allocation10 + $0x50] sm:$0xff]
    %v428 = vld [vmem:[#allocation10 + $0x58] sm:$0xff]
    %v429 = vld [vmem:[#allocation10 + $0x60] sm:$0xff]
    %v430 = vld [vmem:[#allocation10 + $0x68] sm:$0xff]
    %v431 = vld [vmem:[#allocation10 + $0x70] sm:$0xff]
    %v432 = vld [vmem:[#allocation10 + $0x78] sm:$0xff]
    %v433 = vld [vmem:[#allocation10 + $0x80] sm:$0xff]
    %v434 = vld [vmem:[#allocation10 + $0x88] sm:$0xff]
    %v435 = vld [vmem:[#allocation10 + $0x90] sm:$0xff]
    %v436 = vld [vmem:[#allocation10 + $0x98] sm:$0xff]
    %v437 = vld [vmem:[#allocation10 + $0xa0] sm:$0xff]
    %v438 = vld [vmem:[#allocation10 + $0xa8] sm:$0xff]
    %v439 = vld [vmem:[#allocation10 + $0xb0] sm:$0xff]
    %v440 = vld [vmem:[#allocation10 + $0xb8] sm:$0xff]
    %v441 = vld [vmem:[#allocation10 + $0xc0] sm:$0xff]
    %v442 = vld [vmem:[#allocation10 + $0xc8] sm:$0xff]
    %v443 = vld [vmem:[#allocation10 + $0xd0] sm:$0xff]
    %v444 = vld [vmem:[#allocation10 + $0xd8] sm:$0xff]
    %v445 = vld [vmem:[#allocation10 + $0xe0] sm:$0xff]
    %v446 = vld [vmem:[#allocation10 + $0xe8] sm:$0xff]
    %v447 = vld [vmem:[#allocation10 + $0xf0] sm:$0xff]
    %v448 = vld [vmem:[#allocation10 + $0xf8] sm:$0xff]
    %v449 = vld [vmem:[#allocation10 + $0x100] sm:$0xff]
    %v450 = vld [vmem:[#allocation10 + $0x108] sm:$0xff]
    %v451 = vld [vmem:[#allocation10 + $0x110] sm:$0xff]
    %v452 = vld [vmem:[#allocation10 + $0x118] sm:$0xff]
    %v453 = vld [vmem:[#allocation10 + $0x120] sm:$0xff]
    %v454 = vld [vmem:[#allocation10 + $0x128] sm:$0xff]
    %v455 = vld [vmem:[#allocation10 + $0x130] sm:$0xff]
    %v456 = vld [vmem:[#allocation10 + $0x138] sm:$0xff]
    %v457 = vld [vmem:[#allocation10 + $0x140] sm:$0xff]
    %v458 = vld [vmem:[#allocation10 + $0x148] sm:$0xff]
    %v459 = vld [vmem:[#allocation10 + $0x150] sm:$0xff]
    %v460 = vld [vmem:[#allocation10 + $0x158] sm:$0xff]
    %v461 = vld [vmem:[#allocation10 + $0x160] sm:$0xff]
    %v462 = vld [vmem:[#allocation10 + $0x168] sm:$0xff]
    %v463 = vld [vmem:[#allocation10 + $0x170] sm:$0xff]
    %v464 = vld [vmem:[#allocation10 + $0x178] sm:$0xff]
    %v465 = vld [vmem:[#allocation10 + $0x180] sm:$0xff]
    %v466 = vld [vmem:[#allocation10 + $0x188] sm:$0xff]
    %v467 = vld [vmem:[#allocation10 + $0x190] sm:$0xff]
    %v468 = vld [vmem:[#allocation10 + $0x198] sm:$0xff]
    %v469 = vld [vmem:[#allocation10 + $0x1a0] sm:$0xff]
    %v470 = vld [vmem:[#allocation10 + $0x1a8] sm:$0xff]
    %v471 = vld [vmem:[#allocation10 + $0x1b0] sm:$0xff]
    %v472 = vld [vmem:[#allocation10 + $0x1b8] sm:$0xff]
    %v473 = vld [vmem:[#allocation10 + $0x1c0] sm:$0xff]
    %v474 = vld [vmem:[#allocation10 + $0x1c8] sm:$0xff]
    %v475 = vld [vmem:[#allocation10 + $0x1d0] sm:$0xff]
    %v476 = vld [vmem:[#allocation10 + $0x1d8] sm:$0xff]
    %v477 = vld [vmem:[#allocation10 + $0x1e0] sm:$0xff]
    %v478 = vld [vmem:[#allocation10 + $0x1e8] sm:$0xff]
    %v479 = vld [vmem:[#allocation10 + $0x1f0] sm:$0xff]
    %v480 = vld [vmem:[#allocation10 + $0x1f8] sm:$0xff]
    %v481 = vld [vmem:[#allocation3] sm:$0xff]
    %v482 = vld [vmem:[#allocation4] sm:$0xff]
    %v483 = vld [vmem:[#allocation2] sm:$0xff]
    %v484 = vld [vmem:[#allocation2 + $0x8] sm:$0xff]
    %v485 = vld [vmem:[#allocation2 + $0x10] sm:$0xff]
    %v486 = vld [vmem:[#allocation2 + $0x18] sm:$0xff]
    %487 = vmatprep.subr.mxu0 %v418
    %488 = vmatpush1.msra.mxu0 %v417
    %489 = vmatprep.subr.mxu0 %v422
    %490 = vmatpush1.msra.mxu0 %v421
    %491 = vmatprep.subr.mxu0 %v426
    %492 = vmatpush1.msra.mxu0 %v425
    %493 = vmatprep.subr.mxu0 %v430
    %494 = vmatpush1.msra.mxu0 %v429
    %495 = vmatprep.subr.mxu0 %v434
    %496 = vmatpush1.msra.mxu0 %v433
    %497 = vmatprep.subr.mxu0 %v438
    %498 = vmatpush1.msra.mxu0 %v437
    %499 = vmatprep.subr.mxu0 %v442
    %500 = vmatpush1.msra.mxu0 %v441
    %501 = vmatprep.subr.mxu0 %v446
    %502 = vmatpush1.msra.mxu0 %v445
    %503 = vmatprep.subr.mxu0 %v450
    %504 = vmatpush1.msra.mxu0 %v449
    %505 = vmatprep.subr.mxu0 %v454
    %506 = vmatpush1.msra.mxu0 %v453
    %507 = vmatprep.subr.mxu0 %v458
    %508 = vmatpush1.msra.mxu0 %v457
    %509 = vmatprep.subr.mxu0 %v462
    %510 = vmatpush1.msra.mxu0 %v461
    %511 = vmatprep.subr.mxu0 %v466
    %512 = vmatpush1.msra.mxu0 %v465
    %513 = vmatprep.subr.mxu0 %v470
    %514 = vmatpush1.msra.mxu0 %v469
    %515 = vmatprep.subr.mxu0 %v474
    %516 = vmatpush1.msra.mxu0 %v473
    %517 = vmatprep.subr.mxu0 %v478
    %518 = vmatpush1.msra.mxu0 %v477
    %519 = vmatprep.subr.mxu0 0.0
    %520 = vmatpush1.msra.mxu0 0.0
    %521 = vmatprep.subr.mxu0 0.0
    %522 = vmatpush1.msra.mxu0 0.0
    %523 = vmatprep.subr.mxu0 0.0
    %524 = vmatpush1.msra.mxu0 0.0
    %525 = vmatprep.subr.mxu0 0.0
    %526 = vmatpush1.msra.mxu0 0.0
    %527 = vmatprep.subr.mxu0 0.0
    %528 = vmatpush1.msra.mxu0 0.0
    %529 = vmatprep.subr.mxu0 0.0
    %530 = vmatpush1.msra.mxu0 0.0
    %531 = vmatprep.subr.mxu0 0.0
    %532 = vmatpush1.msra.mxu0 0.0
    %533 = vmatprep.subr.mxu0 0.0
    %534 = vmatpush1.msra.mxu0 0.0
    %535 = vmatprep.subr.mxu0 0.0
    %536 = vmatpush1.msra.mxu0 0.0
    %537 = vmatprep.subr.mxu0 0.0
    %538 = vmatpush1.msra.mxu0 0.0
    %539 = vmatprep.subr.mxu0 0.0
    %540 = vmatpush1.msra.mxu0 0.0
    %541 = vmatprep.subr.mxu0 0.0
    %542 = vmatpush1.msra.mxu0 0.0
    %543 = vmatprep.subr.mxu0 0.0
    %544 = vmatpush1.msra.mxu0 0.0
    %545 = vmatprep.subr.mxu0 0.0
    %546 = vmatpush1.msra.mxu0 0.0
    %547 = vmatprep.subr.mxu0 0.0
    %548 = vmatpush1.msra.mxu0 0.0
    %549 = vmatprep.subr.mxu0 0.0
    %550 = vmatpush1.msra.mxu0 0.0
    %551 = vmatprep.mubr.f32.mxu0 0.0
    %552 = vmatmul.mubr.f32.gmra.mrb[0].mxu0 %v481
    %v553 = vpop.f32.mrb[0].mxu0
    %v554 = vadd.f32 0.0, %v553
    %v555 = vpop.f32.mrb[0].mxu0
    %v556 = vadd.f32 0.0, %v555
    %557 = vdwg.mxu0
    %558 = vmatprep.subr.mxu0 %v420
    %559 = vmatpush1.msra.mxu0 %v419
    %560 = vmatprep.subr.mxu0 %v424
    %561 = vmatpush1.msra.mxu0 %v423
    %562 = vmatprep.subr.mxu0 %v428
    %563 = vmatpush1.msra.mxu0 %v427
    %564 = vmatprep.subr.mxu0 %v432
    %565 = vmatpush1.msra.mxu0 %v431
    %566 = vmatprep.subr.mxu0 %v436
    %567 = vmatpush1.msra.mxu0 %v435
    %568 = vmatprep.subr.mxu0 %v440
    %569 = vmatpush1.msra.mxu0 %v439
    %570 = vmatprep.subr.mxu0 %v444
    %571 = vmatpush1.msra.mxu0 %v443
    %572 = vmatprep.subr.mxu0 %v448
    %573 = vmatpush1.msra.mxu0 %v447
    %574 = vmatprep.subr.mxu0 %v452
    %575 = vmatpush1.msra.mxu0 %v451
    %576 = vmatprep.subr.mxu0 %v456
    %577 = vmatpush1.msra.mxu0 %v455
    %578 = vmatprep.subr.mxu0 %v460
    %579 = vmatpush1.msra.mxu0 %v459
    %580 = vmatprep.subr.mxu0 %v464
    %581 = vmatpush1.msra.mxu0 %v463
    %582 = vmatprep.subr.mxu0 %v468
    %583 = vmatpush1.msra.mxu0 %v467
    %584 = vmatprep.subr.mxu0 %v472
    %585 = vmatpush1.msra.mxu0 %v471
    %586 = vmatprep.subr.mxu0 %v476
    %587 = vmatpush1.msra.mxu0 %v475
    %588 = vmatprep.subr.mxu0 %v480
    %589 = vmatpush1.msra.mxu0 %v479
    %590 = vmatprep.subr.mxu0 0.0
    %591 = vmatpush1.msra.mxu0 0.0
    %592 = vmatprep.subr.mxu0 0.0
    %593 = vmatpush1.msra.mxu0 0.0
    %594 = vmatprep.subr.mxu0 0.0
    %595 = vmatpush1.msra.mxu0 0.0
    %596 = vmatprep.subr.mxu0 0.0
    %597 = vmatpush1.msra.mxu0 0.0
    %598 = vmatprep.subr.mxu0 0.0
    %599 = vmatpush1.msra.mxu0 0.0
    %600 = vmatprep.subr.mxu0 0.0
    %601 = vmatpush1.msra.mxu0 0.0
    %602 = vmatprep.subr.mxu0 0.0
    %603 = vmatpush1.msra.mxu0 0.0
    %604 = vmatprep.subr.mxu0 0.0
    %605 = vmatpush1.msra.mxu0 0.0
    %606 = vmatprep.subr.mxu0 0.0
    %607 = vmatpush1.msra.mxu0 0.0
    %608 = vmatprep.subr.mxu0 0.0
    %609 = vmatpush1.msra.mxu0 0.0
    %610 = vmatprep.subr.mxu0 0.0
    %611 = vmatpush1.msra.mxu0 0.0
    %612 = vmatprep.subr.mxu0 0.0
    %613 = vmatpush1.msra.mxu0 0.0
    %614 = vmatprep.subr.mxu0 0.0
    %615 = vmatpush1.msra.mxu0 0.0
    %616 = vmatprep.subr.mxu0 0.0
    %617 = vmatpush1.msra.mxu0 0.0
    %618 = vmatprep.subr.mxu0 0.0
    %619 = vmatpush1.msra.mxu0 0.0
    %620 = vmatprep.subr.mxu0 0.0
    %621 = vmatpush1.msra.mxu0 0.0
    %622 = vmatprep.mubr.f32.mxu0 0.0
    %623 = vmatmul.mubr.f32.gmra.mrb[0].mxu0 %v481
    %v624 = vpop.f32.mrb[0].mxu0
    %v625 = vadd.f32 0.0, %v624
    %v626 = vpop.f32.mrb[0].mxu0
    %v627 = vadd.f32 0.0, %v626
    %628 = vdwg.mxu0
    %v629 = vadd.f32 %v483, %v554
    %v630 = vadd.f32 %v484, %v556
    %v631 = vadd.f32 %v485, %v625
    %v632 = vadd.f32 %v486, %v627
    %v633 = vxor.u32 %v629, 2147483648
    %v634 = vmul.f32 %v633, 1.442695
    %v635 = vpow.pop %v634
    %v636 = vadd.f32 %v635, 1.0
    %v637 = vrcp.pop %v636
    %v638 = vmul.f32 1.0, %v637
    %v639 = vxor.u32 %v630, 2147483648
    %v640 = vmul.f32 %v639, 1.442695
    %v641 = vpow.pop %v640
    %v642 = vadd.f32 %v641, 1.0
    %v643 = vrcp.pop %v642
    %v644 = vmul.f32 1.0, %v643
    %v645 = vtanh.pop %v631
    %v646 = vxor.u32 %v632, 2147483648
    %v647 = vmul.f32 %v646, 1.442695
    %v648 = vpow.pop %v647
    %v649 = vadd.f32 %v648, 1.0
    %v650 = vrcp.pop %v649
    %v651 = vmul.f32 1.0, %v650
    %v652 = vmul.f32 %v644, %v482
    %v653 = vmul.f32 %v638, %v645
    %v654 = vadd.f32 %v652, %v653
    %v655 = vtanh.pop %v654
    %v656 = vmul.f32 %v651, %v655
    %s657 = scalar_lea.vmem [#allocation2], 32
    %v658 = vld [vmem:[%s657] sm:$0xff]
    %v659 = vld [vmem:[%s657 + $0x8] sm:$0xff]
    %v660 = vld [vmem:[%s657 + $0x10] sm:$0xff]
    %v661 = vld [vmem:[%s657 + $0x18] sm:$0xff]
    %662 = vmatprep.subr.mxu0 %v418
    %663 = vmatpush1.msra.mxu0 %v417
    %664 = vmatprep.subr.mxu0 %v422
    %665 = vmatpush1.msra.mxu0 %v421
    %666 = vmatprep.subr.mxu0 %v426
    %667 = vmatpush1.msra.mxu0 %v425
    %668 = vmatprep.subr.mxu0 %v430
    %669 = vmatpush1.msra.mxu0 %v429
    %670 = vmatprep.subr.mxu0 %v434
    %671 = vmatpush1.msra.mxu0 %v433
    %672 = vmatprep.subr.mxu0 %v438
    %673 = vmatpush1.msra.mxu0 %v437
    %674 = vmatprep.subr.mxu0 %v442
    %675 = vmatpush1.msra.mxu0 %v441
    %676 = vmatprep.subr.mxu0 %v446
    %677 = vmatpush1.msra.mxu0 %v445
    %678 = vmatprep.subr.mxu0 %v450
    %679 = vmatpush1.msra.mxu0 %v449
    %680 = vmatprep.subr.mxu0 %v454
    %681 = vmatpush1.msra.mxu0 %v453
    %682 = vmatprep.subr.mxu0 %v458
    %683 = vmatpush1.msra.mxu0 %v457
    %684 = vmatprep.subr.mxu0 %v462
    %685 = vmatpush1.msra.mxu0 %v461
    %686 = vmatprep.subr.mxu0 %v466
    %687 = vmatpush1.msra.mxu0 %v465
    %688 = vmatprep.subr.mxu0 %v470
    %689 = vmatpush1.msra.mxu0 %v469
    %690 = vmatprep.subr.mxu0 %v474
    %691 = vmatpush1.msra.mxu0 %v473
    %692 = vmatprep.subr.mxu0 %v478
    %693 = vmatpush1.msra.mxu0 %v477
    %694 = vmatprep.subr.mxu0 0.0
    %695 = vmatpush1.msra.mxu0 0.0
    %696 = vmatprep.subr.mxu0 0.0
    %697 = vmatpush1.msra.mxu0 0.0
    %698 = vmatprep.subr.mxu0 0.0
    %699 = vmatpush1.msra.mxu0 0.0
    %700 = vmatprep.subr.mxu0 0.0
    %701 = vmatpush1.msra.mxu0 0.0
    %702 = vmatprep.subr.mxu0 0.0
    %703 = vmatpush1.msra.mxu0 0.0
    %704 = vmatprep.subr.mxu0 0.0
    %705 = vmatpush1.msra.mxu0 0.0
    %706 = vmatprep.subr.mxu0 0.0
    %707 = vmatpush1.msra.mxu0 0.0
    %708 = vmatprep.subr.mxu0 0.0
    %709 = vmatpush1.msra.mxu0 0.0
    %710 = vmatprep.subr.mxu0 0.0
    %711 = vmatpush1.msra.mxu0 0.0
    %712 = vmatprep.subr.mxu0 0.0
    %713 = vmatpush1.msra.mxu0 0.0
    %714 = vmatprep.subr.mxu0 0.0
    %715 = vmatpush1.msra.mxu0 0.0
    %716 = vmatprep.subr.mxu0 0.0
    %717 = vmatpush1.msra.mxu0 0.0
    %718 = vmatprep.subr.mxu0 0.0
    %719 = vmatpush1.msra.mxu0 0.0
    %720 = vmatprep.subr.mxu0 0.0
    %721 = vmatpush1.msra.mxu0 0.0
    %722 = vmatprep.subr.mxu0 0.0
    %723 = vmatpush1.msra.mxu0 0.0
    %724 = vmatprep.subr.mxu0 0.0
    %725 = vmatpush1.msra.mxu0 0.0
    %726 = vmatprep.mubr.f32.mxu0 0.0
    %727 = vmatmul.mubr.f32.gmra.mrb[0].mxu0 %v656
    %v728 = vpop.f32.mrb[0].mxu0
    %v729 = vadd.f32 0.0, %v728
    %v730 = vpop.f32.mrb[0].mxu0
    %v731 = vadd.f32 0.0, %v730
    %732 = vdwg.mxu0
    %733 = vmatprep.subr.mxu0 %v420
    %734 = vmatpush1.msra.mxu0 %v419
    %735 = vmatprep.subr.mxu0 %v424
    %736 = vmatpush1.msra.mxu0 %v423
    %737 = vmatprep.subr.mxu0 %v428
    %738 = vmatpush1.msra.mxu0 %v427
    %739 = vmatprep.subr.mxu0 %v432
    %740 = vmatpush1.msra.mxu0 %v431
    %741 = vmatprep.subr.mxu0 %v436
    %742 = vmatpush1.msra.mxu0 %v435
    %743 = vmatprep.subr.mxu0 %v440
    %744 = vmatpush1.msra.mxu0 %v439
    %745 = vmatprep.subr.mxu0 %v444
    %746 = vmatpush1.msra.mxu0 %v443
    %747 = vmatprep.subr.mxu0 %v448
    %748 = vmatpush1.msra.mxu0 %v447
    %749 = vmatprep.subr.mxu0 %v452
    %750 = vmatpush1.msra.mxu0 %v451
    %751 = vmatprep.subr.mxu0 %v456
    %752 = vmatpush1.msra.mxu0 %v455
    %753 = vmatprep.subr.mxu0 %v460
    %754 = vmatpush1.msra.mxu0 %v459
    %755 = vmatprep.subr.mxu0 %v464
    %756 = vmatpush1.msra.mxu0 %v463
    %757 = vmatprep.subr.mxu0 %v468
    %758 = vmatpush1.msra.mxu0 %v467
    %759 = vmatprep.subr.mxu0 %v472
    %760 = vmatpush1.msra.mxu0 %v471
    %761 = vmatprep.subr.mxu0 %v476
    %762 = vmatpush1.msra.mxu0 %v475
    %763 = vmatprep.subr.mxu0 %v480
    %764 = vmatpush1.msra.mxu0 %v479
    %765 = vmatprep.subr.mxu0 0.0
    %766 = vmatpush1.msra.mxu0 0.0
    %767 = vmatprep.subr.mxu0 0.0
    %768 = vmatpush1.msra.mxu0 0.0
    %769 = vmatprep.subr.mxu0 0.0
    %770 = vmatpush1.msra.mxu0 0.0
    %771 = vmatprep.subr.mxu0 0.0
    %772 = vmatpush1.msra.mxu0 0.0
    %773 = vmatprep.subr.mxu0 0.0
    %774 = vmatpush1.msra.mxu0 0.0
    %775 = vmatprep.subr.mxu0 0.0
    %776 = vmatpush1.msra.mxu0 0.0
    %777 = vmatprep.subr.mxu0 0.0
    %778 = vmatpush1.msra.mxu0 0.0
    %779 = vmatprep.subr.mxu0 0.0
    %780 = vmatpush1.msra.mxu0 0.0
    %781 = vmatprep.subr.mxu0 0.0
    %782 = vmatpush1.msra.mxu0 0.0
    %783 = vmatprep.subr.mxu0 0.0
    %784 = vmatpush1.msra.mxu0 0.0
    %785 = vmatprep.subr.mxu0 0.0
    %786 = vmatpush1.msra.mxu0 0.0
    %787 = vmatprep.subr.mxu0 0.0
    %788 = vmatpush1.msra.mxu0 0.0
    %789 = vmatprep.subr.mxu0 0.0
    %790 = vmatpush1.msra.mxu0 0.0
    %791 = vmatprep.subr.mxu0 0.0
    %792 = vmatpush1.msra.mxu0 0.0
    %793 = vmatprep.subr.mxu0 0.0
    %794 = vmatpush1.msra.mxu0 0.0
    %795 = vmatprep.subr.mxu0 0.0
    %796 = vmatpush1.msra.mxu0 0.0
    %797 = vmatprep.mubr.f32.mxu0 0.0
    %798 = vmatmul.mubr.f32.gmra.mrb[0].mxu0 %v656
    %v799 = vpop.f32.mrb[0].mxu0
    %v800 = vadd.f32 0.0, %v799
    %v801 = vpop.f32.mrb[0].mxu0
    %v802 = vadd.f32 0.0, %v801
    %803 = vdwg.mxu0
    %v804 = vadd.f32 %v658, %v729
    %v805 = vadd.f32 %v659, %v731
    %v806 = vadd.f32 %v660, %v800
    %v807 = vadd.f32 %v661, %v802
    %v808 = vxor.u32 %v804, 2147483648
    %v809 = vmul.f32 %v808, 1.442695
    %v810 = vpow.pop %v809
    %v811 = vadd.f32 %v810, 1.0
    %v812 = vrcp.pop %v811
    %v813 = vmul.f32 1.0, %v812
    %v814 = vxor.u32 %v805, 2147483648
    %v815 = vmul.f32 %v814, 1.442695
    %v816 = vpow.pop %v815
    %v817 = vadd.f32 %v816, 1.0
    %v818 = vrcp.pop %v817
    %v819 = vmul.f32 1.0, %v818
    %v820 = vtanh.pop %v806
    %v821 = vxor.u32 %v807, 2147483648
    %v822 = vmul.f32 %v821, 1.442695
    %v823 = vpow.pop %v822
    %v824 = vadd.f32 %v823, 1.0
    %v825 = vrcp.pop %v824
    %v826 = vmul.f32 1.0, %v825
    %v827 = vmul.f32 %v819, %v654
    %v828 = vmul.f32 %v813, %v820
    %v829 = vadd.f32 %v827, %v828
    %v830 = vtanh.pop %v829
    %v831 = vmul.f32 %v826, %v830
    %s832 = scalar_lea.vmem [#allocation2], 64
    %v833 = vld [vmem:[%s832] sm:$0xff]
    %v834 = vld [vmem:[%s832 + $0x8] sm:$0xff]
    %v835 = vld [vmem:[%s832 + $0x10] sm:$0xff]
    %v836 = vld [vmem:[%s832 + $0x18] sm:$0xff]
    %837 = vmatprep.subr.mxu0 %v418
    %838 = vmatpush1.msra.mxu0 %v417
    %839 = vmatprep.subr.mxu0 %v422
    %840 = vmatpush1.msra.mxu0 %v421
    %841 = vmatprep.subr.mxu0 %v426
    %842 = vmatpush1.msra.mxu0 %v425
    %843 = vmatprep.subr.mxu0 %v430
    %844 = vmatpush1.msra.mxu0 %v429
    %845 = vmatprep.subr.mxu0 %v434
    %846 = vmatpush1.msra.mxu0 %v433
    %847 = vmatprep.subr.mxu0 %v438
    %848 = vmatpush1.msra.mxu0 %v437
    %849 = vmatprep.subr.mxu0 %v442
    %850 = vmatpush1.msra.mxu0 %v441
    %851 = vmatprep.subr.mxu0 %v446
    %852 = vmatpush1.msra.mxu0 %v445
    %853 = vmatprep.subr.mxu0 %v450
    %854 = vmatpush1.msra.mxu0 %v449
    %855 = vmatprep.subr.mxu0 %v454
    %856 = vmatpush1.msra.mxu0 %v453
    %857 = vmatprep.subr.mxu0 %v458
    %858 = vmatpush1.msra.mxu0 %v457
    %859 = vmatprep.subr.mxu0 %v462
    %860 = vmatpush1.msra.mxu0 %v461
    %861 = vmatprep.subr.mxu0 %v466
    %862 = vmatpush1.msra.mxu0 %v465
    %863 = vmatprep.subr.mxu0 %v470
    %864 = vmatpush1.msra.mxu0 %v469
    %865 = vmatprep.subr.mxu0 %v474
    %866 = vmatpush1.msra.mxu0 %v473
    %867 = vmatprep.subr.mxu0 %v478
    %868 = vmatpush1.msra.mxu0 %v477
    %869 = vmatprep.subr.mxu0 0.0
    %870 = vmatpush1.msra.mxu0 0.0
    %871 = vmatprep.subr.mxu0 0.0
    %872 = vmatpush1.msra.mxu0 0.0
    %873 = vmatprep.subr.mxu0 0.0
    %874 = vmatpush1.msra.mxu0 0.0
    %875 = vmatprep.subr.mxu0 0.0
    %876 = vmatpush1.msra.mxu0 0.0
    %877 = vmatprep.subr.mxu0 0.0
    %878 = vmatpush1.msra.mxu0 0.0
    %879 = vmatprep.subr.mxu0 0.0
    %880 = vmatpush1.msra.mxu0 0.0
    %881 = vmatprep.subr.mxu0 0.0
    %882 = vmatpush1.msra.mxu0 0.0
    %883 = vmatprep.subr.mxu0 0.0
    %884 = vmatpush1.msra.mxu0 0.0
    %885 = vmatprep.subr.mxu0 0.0
    %886 = vmatpush1.msra.mxu0 0.0
    %887 = vmatprep.subr.mxu0 0.0
    %888 = vmatpush1.msra.mxu0 0.0
    %889 = vmatprep.subr.mxu0 0.0
    %890 = vmatpush1.msra.mxu0 0.0
    %891 = vmatprep.subr.mxu0 0.0
    %892 = vmatpush1.msra.mxu0 0.0
    %893 = vmatprep.subr.mxu0 0.0
    %894 = vmatpush1.msra.mxu0 0.0
    %895 = vmatprep.subr.mxu0 0.0
    %896 = vmatpush1.msra.mxu0 0.0
    %897 = vmatprep.subr.mxu0 0.0
    %898 = vmatpush1.msra.mxu0 0.0
    %899 = vmatprep.subr.mxu0 0.0
    %900 = vmatpush1.msra.mxu0 0.0
    %901 = vmatprep.mubr.f32.mxu0 0.0
    %902 = vmatmul.mubr.f32.gmra.mrb[0].mxu0 %v831
    %v903 = vpop.f32.mrb[0].mxu0
    %v904 = vadd.f32 0.0, %v903
    %v905 = vpop.f32.mrb[0].mxu0
    %v906 = vadd.f32 0.0, %v905
    %907 = vdwg.mxu0
    %908 = vmatprep.subr.mxu0 %v420
    %909 = vmatpush1.msra.mxu0 %v419
    %910 = vmatprep.subr.mxu0 %v424
    %911 = vmatpush1.msra.mxu0 %v423
    %912 = vmatprep.subr.mxu0 %v428
    %913 = vmatpush1.msra.mxu0 %v427
    %914 = vmatprep.subr.mxu0 %v432
    %915 = vmatpush1.msra.mxu0 %v431
    %916 = vmatprep.subr.mxu0 %v436
    %917 = vmatpush1.msra.mxu0 %v435
    %918 = vmatprep.subr.mxu0 %v440
    %919 = vmatpush1.msra.mxu0 %v439
    %920 = vmatprep.subr.mxu0 %v444
    %921 = vmatpush1.msra.mxu0 %v443
    %922 = vmatprep.subr.mxu0 %v448
    %923 = vmatpush1.msra.mxu0 %v447
    %924 = vmatprep.subr.mxu0 %v452
    %925 = vmatpush1.msra.mxu0 %v451
    %926 = vmatprep.subr.mxu0 %v456
    %927 = vmatpush1.msra.mxu0 %v455
    %928 = vmatprep.subr.mxu0 %v460
    %929 = vmatpush1.msra.mxu0 %v459
    %930 = vmatprep.subr.mxu0 %v464
    %931 = vmatpush1.msra.mxu0 %v463
    %932 = vmatprep.subr.mxu0 %v468
    %933 = vmatpush1.msra.mxu0 %v467
    %934 = vmatprep.subr.mxu0 %v472
    %935 = vmatpush1.msra.mxu0 %v471
    %936 = vmatprep.subr.mxu0 %v476
    %937 = vmatpush1.msra.mxu0 %v475
    %938 = vmatprep.subr.mxu0 %v480
    %939 = vmatpush1.msra.mxu0 %v479
    %940 = vmatprep.subr.mxu0 0.0
    %941 = vmatpush1.msra.mxu0 0.0
    %942 = vmatprep.subr.mxu0 0.0
    %943 = vmatpush1.msra.mxu0 0.0
    %944 = vmatprep.subr.mxu0 0.0
    %945 = vmatpush1.msra.mxu0 0.0
    %946 = vmatprep.subr.mxu0 0.0
    %947 = vmatpush1.msra.mxu0 0.0
    %948 = vmatprep.subr.mxu0 0.0
    %949 = vmatpush1.msra.mxu0 0.0
    %950 = vmatprep.subr.mxu0 0.0
    %951 = vmatpush1.msra.mxu0 0.0
    %952 = vmatprep.subr.mxu0 0.0
    %953 = vmatpush1.msra.mxu0 0.0
    %954 = vmatprep.subr.mxu0 0.0
    %955 = vmatpush1.msra.mxu0 0.0
    %956 = vmatprep.subr.mxu0 0.0
    %957 = vmatpush1.msra.mxu0 0.0
    %958 = vmatprep.subr.mxu0 0.0
    %959 = vmatpush1.msra.mxu0 0.0
    %960 = vmatprep.subr.mxu0 0.0
    %961 = vmatpush1.msra.mxu0 0.0
    %962 = vmatprep.subr.mxu0 0.0
    %963 = vmatpush1.msra.mxu0 0.0
    %964 = vmatprep.subr.mxu0 0.0
    %965 = vmatpush1.msra.mxu0 0.0
    %966 = vmatprep.subr.mxu0 0.0
    %967 = vmatpush1.msra.mxu0 0.0
    %968 = vmatprep.subr.mxu0 0.0
    %969 = vmatpush1.msra.mxu0 0.0
    %970 = vmatprep.subr.mxu0 0.0
    %971 = vmatpush1.msra.mxu0 0.0
    %972 = vmatprep.mubr.f32.mxu0 0.0
    %973 = vmatmul.mubr.f32.gmra.mrb[0].mxu0 %v831
    %v974 = vpop.f32.mrb[0].mxu0
    %v975 = vadd.f32 0.0, %v974
    %v976 = vpop.f32.mrb[0].mxu0
    %v977 = vadd.f32 0.0, %v976
    %978 = vdwg.mxu0
    %v979 = vadd.f32 %v833, %v904
    %v980 = vadd.f32 %v834, %v906
    %v981 = vadd.f32 %v835, %v975
    %v982 = vadd.f32 %v836, %v977
    %v983 = vxor.u32 %v979, 2147483648
    %v984 = vmul.f32 %v983, 1.442695
    %v985 = vpow.pop %v984
    %v986 = vadd.f32 %v985, 1.0
    %v987 = vrcp.pop %v986
    %v988 = vmul.f32 1.0, %v987
    %v989 = vxor.u32 %v980, 2147483648
    %v990 = vmul.f32 %v989, 1.442695
    %v991 = vpow.pop %v990
    %v992 = vadd.f32 %v991, 1.0
    %v993 = vrcp.pop %v992
    %v994 = vmul.f32 1.0, %v993
    %v995 = vtanh.pop %v981
    %v996 = vxor.u32 %v982, 2147483648
    %v997 = vmul.f32 %v996, 1.442695
    %v998 = vpow.pop %v997
    %v999 = vadd.f32 %v998, 1.0
    %v1000 = vrcp.pop %v999
    %v1001 = vmul.f32 1.0, %v1000
    %v1002 = vmul.f32 %v994, %v829
    %v1003 = vmul.f32 %v988, %v995
    %v1004 = vadd.f32 %v1002, %v1003
    %v1005 = vtanh.pop %v1004
    %v1006 = vmul.f32 %v1001, %v1005
    %s1007 = scalar_lea.vmem [#allocation2], 96
    %v1008 = vld [vmem:[%s1007] sm:$0xff]
    %v1009 = vld [vmem:[%s1007 + $0x8] sm:$0xff]
    %v1010 = vld [vmem:[%s1007 + $0x10] sm:$0xff]
    %v1011 = vld [vmem:[%s1007 + $0x18] sm:$0xff]
    %1012 = vmatprep.subr.mxu0 %v418
    %1013 = vmatpush1.msra.mxu0 %v417
    %1014 = vmatprep.subr.mxu0 %v422
    %1015 = vmatpush1.msra.mxu0 %v421
    %1016 = vmatprep.subr.mxu0 %v426
    %1017 = vmatpush1.msra.mxu0 %v425
    %1018 = vmatprep.subr.mxu0 %v430
    %1019 = vmatpush1.msra.mxu0 %v429
    %1020 = vmatprep.subr.mxu0 %v434
    %1021 = vmatpush1.msra.mxu0 %v433
    %1022 = vmatprep.subr.mxu0 %v438
    %1023 = vmatpush1.msra.mxu0 %v437
    %1024 = vmatprep.subr.mxu0 %v442
    %1025 = vmatpush1.msra.mxu0 %v441
    %1026 = vmatprep.subr.mxu0 %v446
    %1027 = vmatpush1.msra.mxu0 %v445
    %1028 = vmatprep.subr.mxu0 %v450
    %1029 = vmatpush1.msra.mxu0 %v449
    %1030 = vmatprep.subr.mxu0 %v454
    %1031 = vmatpush1.msra.mxu0 %v453
    %1032 = vmatprep.subr.mxu0 %v458
    %1033 = vmatpush1.msra.mxu0 %v457
    %1034 = vmatprep.subr.mxu0 %v462
    %1035 = vmatpush1.msra.mxu0 %v461
    %1036 = vmatprep.subr.mxu0 %v466
    %1037 = vmatpush1.msra.mxu0 %v465
    %1038 = vmatprep.subr.mxu0 %v470
    %1039 = vmatpush1.msra.mxu0 %v469
    %1040 = vmatprep.subr.mxu0 %v474
    %1041 = vmatpush1.msra.mxu0 %v473
    %1042 = vmatprep.subr.mxu0 %v478
    %1043 = vmatpush1.msra.mxu0 %v477
    %1044 = vmatprep.subr.mxu0 0.0
    %1045 = vmatpush1.msra.mxu0 0.0
    %1046 = vmatprep.subr.mxu0 0.0
    %1047 = vmatpush1.msra.mxu0 0.0
    %1048 = vmatprep.subr.mxu0 0.0
    %1049 = vmatpush1.msra.mxu0 0.0
    %1050 = vmatprep.subr.mxu0 0.0
    %1051 = vmatpush1.msra.mxu0 0.0
    %1052 = vmatprep.subr.mxu0 0.0
    %1053 = vmatpush1.msra.mxu0 0.0
    %1054 = vmatprep.subr.mxu0 0.0
    %1055 = vmatpush1.msra.mxu0 0.0
    %1056 = vmatprep.subr.mxu0 0.0
    %1057 = vmatpush1.msra.mxu0 0.0
    %1058 = vmatprep.subr.mxu0 0.0
    %1059 = vmatpush1.msra.mxu0 0.0
    %1060 = vmatprep.subr.mxu0 0.0
    %1061 = vmatpush1.msra.mxu0 0.0
    %1062 = vmatprep.subr.mxu0 0.0
    %1063 = vmatpush1.msra.mxu0 0.0
    %1064 = vmatprep.subr.mxu0 0.0
    %1065 = vmatpush1.msra.mxu0 0.0
    %1066 = vmatprep.subr.mxu0 0.0
    %1067 = vmatpush1.msra.mxu0 0.0
    %1068 = vmatprep.subr.mxu0 0.0
    %1069 = vmatpush1.msra.mxu0 0.0
    %1070 = vmatprep.subr.mxu0 0.0
    %1071 = vmatpush1.msra.mxu0 0.0
    %1072 = vmatprep.subr.mxu0 0.0
    %1073 = vmatpush1.msra.mxu0 0.0
    %1074 = vmatprep.subr.mxu0 0.0
    %1075 = vmatpush1.msra.mxu0 0.0
    %1076 = vmatprep.mubr.f32.mxu0 0.0
    %1077 = vmatmul.mubr.f32.gmra.mrb[0].mxu0 %v1006
    %v1078 = vpop.f32.mrb[0].mxu0
    %v1079 = vadd.f32 0.0, %v1078
    %v1080 = vpop.f32.mrb[0].mxu0
    %v1081 = vadd.f32 0.0, %v1080
    %1082 = vdwg.mxu0
    %1083 = vmatprep.subr.mxu0 %v420
    %1084 = vmatpush1.msra.mxu0 %v419
    %1085 = vmatprep.subr.mxu0 %v424
    %1086 = vmatpush1.msra.mxu0 %v423
    %1087 = vmatprep.subr.mxu0 %v428
    %1088 = vmatpush1.msra.mxu0 %v427
    %1089 = vmatprep.subr.mxu0 %v432
    %1090 = vmatpush1.msra.mxu0 %v431
    %1091 = vmatprep.subr.mxu0 %v436
    %1092 = vmatpush1.msra.mxu0 %v435
    %1093 = vmatprep.subr.mxu0 %v440
    %1094 = vmatpush1.msra.mxu0 %v439
    %1095 = vmatprep.subr.mxu0 %v444
    %1096 = vmatpush1.msra.mxu0 %v443
    %1097 = vmatprep.subr.mxu0 %v448
    %1098 = vmatpush1.msra.mxu0 %v447
    %1099 = vmatprep.subr.mxu0 %v452
    %1100 = vmatpush1.msra.mxu0 %v451
    %1101 = vmatprep.subr.mxu0 %v456
    %1102 = vmatpush1.msra.mxu0 %v455
    %1103 = vmatprep.subr.mxu0 %v460
    %1104 = vmatpush1.msra.mxu0 %v459
    %1105 = vmatprep.subr.mxu0 %v464
    %1106 = vmatpush1.msra.mxu0 %v463
    %1107 = vmatprep.subr.mxu0 %v468
    %1108 = vmatpush1.msra.mxu0 %v467
    %1109 = vmatprep.subr.mxu0 %v472
    %1110 = vmatpush1.msra.mxu0 %v471
    %1111 = vmatprep.subr.mxu0 %v476
    %1112 = vmatpush1.msra.mxu0 %v475
    %1113 = vmatprep.subr.mxu0 %v480
    %1114 = vmatpush1.msra.mxu0 %v479
    %1115 = vmatprep.subr.mxu0 0.0
    %1116 = vmatpush1.msra.mxu0 0.0
    %1117 = vmatprep.subr.mxu0 0.0
    %1118 = vmatpush1.msra.mxu0 0.0
    %1119 = vmatprep.subr.mxu0 0.0
    %1120 = vmatpush1.msra.mxu0 0.0
    %1121 = vmatprep.subr.mxu0 0.0
    %1122 = vmatpush1.msra.mxu0 0.0
    %1123 = vmatprep.subr.mxu0 0.0
    %1124 = vmatpush1.msra.mxu0 0.0
    %1125 = vmatprep.subr.mxu0 0.0
    %1126 = vmatpush1.msra.mxu0 0.0
    %1127 = vmatprep.subr.mxu0 0.0
    %1128 = vmatpush1.msra.mxu0 0.0
    %1129 = vmatprep.subr.mxu0 0.0
    %1130 = vmatpush1.msra.mxu0 0.0
    %1131 = vmatprep.subr.mxu0 0.0
    %1132 = vmatpush1.msra.mxu0 0.0
    %1133 = vmatprep.subr.mxu0 0.0
    %1134 = vmatpush1.msra.mxu0 0.0
    %1135 = vmatprep.subr.mxu0 0.0
    %1136 = vmatpush1.msra.mxu0 0.0
    %1137 = vmatprep.subr.mxu0 0.0
    %1138 = vmatpush1.msra.mxu0 0.0
    %1139 = vmatprep.subr.mxu0 0.0
    %1140 = vmatpush1.msra.mxu0 0.0
    %1141 = vmatprep.subr.mxu0 0.0
    %1142 = vmatpush1.msra.mxu0 0.0
    %1143 = vmatprep.subr.mxu0 0.0
    %1144 = vmatpush1.msra.mxu0 0.0
    %1145 = vmatprep.subr.mxu0 0.0
    %1146 = vmatpush1.msra.mxu0 0.0
    %1147 = vmatprep.mubr.f32.mxu0 0.0
    %1148 = vmatmul.mubr.f32.gmra.mrb[0].mxu0 %v1006
    %v1149 = vpop.f32.mrb[0].mxu0
    %v1150 = vadd.f32 0.0, %v1149
    %v1151 = vpop.f32.mrb[0].mxu0
    %v1152 = vadd.f32 0.0, %v1151
    %1153 = vdwg.mxu0
    %v1154 = vadd.f32 %v1008, %v1079
    %v1155 = vadd.f32 %v1009, %v1081
    %v1156 = vadd.f32 %v1010, %v1150
    %v1157 = vadd.f32 %v1011, %v1152
    %v1158 = vxor.u32 %v1154, 2147483648
    %v1159 = vmul.f32 %v1158, 1.442695
    %v1160 = vpow.pop %v1159
    %v1161 = vadd.f32 %v1160, 1.0
    %v1162 = vrcp.pop %v1161
    %v1163 = vmul.f32 1.0, %v1162
    %v1164 = vxor.u32 %v1155, 2147483648
    %v1165 = vmul.f32 %v1164, 1.442695
    %v1166 = vpow.pop %v1165
    %v1167 = vadd.f32 %v1166, 1.0
    %v1168 = vrcp.pop %v1167
    %v1169 = vmul.f32 1.0, %v1168
    %v1170 = vtanh.pop %v1156
    %v1171 = vxor.u32 %v1157, 2147483648
    %v1172 = vmul.f32 %v1171, 1.442695
    %v1173 = vpow.pop %v1172
    %v1174 = vadd.f32 %v1173, 1.0
    %v1175 = vrcp.pop %v1174
    %v1176 = vmul.f32 1.0, %v1175
    %v1177 = vmul.f32 %v1169, %v1004
    %v1178 = vmul.f32 %v1163, %v1170
    %v1179 = vadd.f32 %v1177, %v1178
    %v1180 = vtanh.pop %v1179
    %v1181 = vmul.f32 %v1176, %v1180
    %s1182 = scalar_lea.vmem [#allocation2], 128
    %v1183 = vld [vmem:[%s1182] sm:$0xff]
    %v1184 = vld [vmem:[%s1182 + $0x8] sm:$0xff]
    %v1185 = vld [vmem:[%s1182 + $0x10] sm:$0xff]
    %v1186 = vld [vmem:[%s1182 + $0x18] sm:$0xff]
    %1187 = vmatprep.subr.mxu0 %v418
    %1188 = vmatpush1.msra.mxu0 %v417
    %1189 = vmatprep.subr.mxu0 %v422
    %1190 = vmatpush1.msra.mxu0 %v421
    %1191 = vmatprep.subr.mxu0 %v426
    %1192 = vmatpush1.msra.mxu0 %v425
    %1193 = vmatprep.subr.mxu0 %v430
    %1194 = vmatpush1.msra.mxu0 %v429
    %1195 = vmatprep.subr.mxu0 %v434
    %1196 = vmatpush1.msra.mxu0 %v433
    %1197 = vmatprep.subr.mxu0 %v438
    %1198 = vmatpush1.msra.mxu0 %v437
    %1199 = vmatprep.subr.mxu0 %v442
    %1200 = vmatpush1.msra.mxu0 %v441
    %1201 = vmatprep.subr.mxu0 %v446
    %1202 = vmatpush1.msra.mxu0 %v445
    %1203 = vmatprep.subr.mxu0 %v450
    %1204 = vmatpush1.msra.mxu0 %v449
    %1205 = vmatprep.subr.mxu0 %v454
    %1206 = vmatpush1.msra.mxu0 %v453
    %1207 = vmatprep.subr.mxu0 %v458
    %1208 = vmatpush1.msra.mxu0 %v457
    %1209 = vmatprep.subr.mxu0 %v462
    %1210 = vmatpush1.msra.mxu0 %v461
    %1211 = vmatprep.subr.mxu0 %v466
    %1212 = vmatpush1.msra.mxu0 %v465
    %1213 = vmatprep.subr.mxu0 %v470
    %1214 = vmatpush1.msra.mxu0 %v469
    %1215 = vmatprep.subr.mxu0 %v474
    %1216 = vmatpush1.msra.mxu0 %v473
    %1217 = vmatprep.subr.mxu0 %v478
    %1218 = vmatpush1.msra.mxu0 %v477
    %1219 = vmatprep.subr.mxu0 0.0
    %1220 = vmatpush1.msra.mxu0 0.0
    %1221 = vmatprep.subr.mxu0 0.0
    %1222 = vmatpush1.msra.mxu0 0.0
    %1223 = vmatprep.subr.mxu0 0.0
    %1224 = vmatpush1.msra.mxu0 0.0
    %1225 = vmatprep.subr.mxu0 0.0
    %1226 = vmatpush1.msra.mxu0 0.0
    %1227 = vmatprep.subr.mxu0 0.0
    %1228 = vmatpush1.msra.mxu0 0.0
    %1229 = vmatprep.subr.mxu0 0.0
    %1230 = vmatpush1.msra.mxu0 0.0
    %1231 = vmatprep.subr.mxu0 0.0
    %1232 = vmatpush1.msra.mxu0 0.0
    %1233 = vmatprep.subr.mxu0 0.0
    %1234 = vmatpush1.msra.mxu0 0.0
    %1235 = vmatprep.subr.mxu0 0.0
    %1236 = vmatpush1.msra.mxu0 0.0
    %1237 = vmatprep.subr.mxu0 0.0
    %1238 = vmatpush1.msra.mxu0 0.0
    %1239 = vmatprep.subr.mxu0 0.0
    %1240 = vmatpush1.msra.mxu0 0.0
    %1241 = vmatprep.subr.mxu0 0.0
    %1242 = vmatpush1.msra.mxu0 0.0
    %1243 = vmatprep.subr.mxu0 0.0
    %1244 = vmatpush1.msra.mxu0 0.0
    %1245 = vmatprep.subr.mxu0 0.0
    %1246 = vmatpush1.msra.mxu0 0.0
    %1247 = vmatprep.subr.mxu0 0.0
    %1248 = vmatpush1.msra.mxu0 0.0
    %1249 = vmatprep.subr.mxu0 0.0
    %1250 = vmatpush1.msra.mxu0 0.0
    %1251 = vmatprep.mubr.f32.mxu0 0.0
    %1252 = vmatmul.mubr.f32.gmra.mrb[0].mxu0 %v1181
    %v1253 = vpop.f32.mrb[0].mxu0
    %v1254 = vadd.f32 0.0, %v1253
    %v1255 = vpop.f32.mrb[0].mxu0
    %v1256 = vadd.f32 0.0, %v1255
    %1257 = vdwg.mxu0
    %1258 = vmatprep.subr.mxu0 %v420
    %1259 = vmatpush1.msra.mxu0 %v419
    %1260 = vmatprep.subr.mxu0 %v424
    %1261 = vmatpush1.msra.mxu0 %v423
    %1262 = vmatprep.subr.mxu0 %v428
    %1263 = vmatpush1.msra.mxu0 %v427
    %1264 = vmatprep.subr.mxu0 %v432
    %1265 = vmatpush1.msra.mxu0 %v431
    %1266 = vmatprep.subr.mxu0 %v436
    %1267 = vmatpush1.msra.mxu0 %v435
    %1268 = vmatprep.subr.mxu0 %v440
    %1269 = vmatpush1.msra.mxu0 %v439
    %1270 = vmatprep.subr.mxu0 %v444
    %1271 = vmatpush1.msra.mxu0 %v443
    %1272 = vmatprep.subr.mxu0 %v448
    %1273 = vmatpush1.msra.mxu0 %v447
    %1274 = vmatprep.subr.mxu0 %v452
    %1275 = vmatpush1.msra.mxu0 %v451
    %1276 = vmatprep.subr.mxu0 %v456
    %1277 = vmatpush1.msra.mxu0 %v455
    %1278 = vmatprep.subr.mxu0 %v460
    %1279 = vmatpush1.msra.mxu0 %v459
    %1280 = vmatprep.subr.mxu0 %v464
    %1281 = vmatpush1.msra.mxu0 %v463
    %1282 = vmatprep.subr.mxu0 %v468
    %1283 = vmatpush1.msra.mxu0 %v467
    %1284 = vmatprep.subr.mxu0 %v472
    %1285 = vmatpush1.msra.mxu0 %v471
    %1286 = vmatprep.subr.mxu0 %v476
    %1287 = vmatpush1.msra.mxu0 %v475
    %1288 = vmatprep.subr.mxu0 %v480
    %1289 = vmatpush1.msra.mxu0 %v479
    %1290 = vmatprep.subr.mxu0 0.0
    %1291 = vmatpush1.msra.mxu0 0.0
    %1292 = vmatprep.subr.mxu0 0.0
    %1293 = vmatpush1.msra.mxu0 0.0
    %1294 = vmatprep.subr.mxu0 0.0
    %1295 = vmatpush1.msra.mxu0 0.0
    %1296 = vmatprep.subr.mxu0 0.0
    %1297 = vmatpush1.msra.mxu0 0.0
    %1298 = vmatprep.subr.mxu0 0.0
    %1299 = vmatpush1.msra.mxu0 0.0
    %1300 = vmatprep.subr.mxu0 0.0
    %1301 = vmatpush1.msra.mxu0 0.0
    %1302 = vmatprep.subr.mxu0 0.0
    %1303 = vmatpush1.msra.mxu0 0.0
    %1304 = vmatprep.subr.mxu0 0.0
    %1305 = vmatpush1.msra.mxu0 0.0
    %1306 = vmatprep.subr.mxu0 0.0
    %1307 = vmatpush1.msra.mxu0 0.0
    %1308 = vmatprep.subr.mxu0 0.0
    %1309 = vmatpush1.msra.mxu0 0.0
    %1310 = vmatprep.subr.mxu0 0.0
    %1311 = vmatpush1.msra.mxu0 0.0
    %1312 = vmatprep.subr.mxu0 0.0
    %1313 = vmatpush1.msra.mxu0 0.0
    %1314 = vmatprep.subr.mxu0 0.0
    %1315 = vmatpush1.msra.mxu0 0.0
    %1316 = vmatprep.subr.mxu0 0.0
    %1317 = vmatpush1.msra.mxu0 0.0
    %1318 = vmatprep.subr.mxu0 0.0
    %1319 = vmatpush1.msra.mxu0 0.0
    %1320 = vmatprep.subr.mxu0 0.0
    %1321 = vmatpush1.msra.mxu0 0.0
    %1322 = vmatprep.mubr.f32.mxu0 0.0
    %1323 = vmatmul.mubr.f32.gmra.mrb[0].mxu0 %v1181
    %v1324 = vpop.f32.mrb[0].mxu0
    %v1325 = vadd.f32 0.0, %v1324
    %v1326 = vpop.f32.mrb[0].mxu0
    %v1327 = vadd.f32 0.0, %v1326
    %1328 = vdwg.mxu0
    %v1329 = vadd.f32 %v1183, %v1254
    %v1330 = vadd.f32 %v1184, %v1256
    %v1331 = vadd.f32 %v1185, %v1325
    %v1332 = vadd.f32 %v1186, %v1327
    %v1333 = vxor.u32 %v1329, 2147483648
    %v1334 = vmul.f32 %v1333, 1.442695
    %v1335 = vpow.pop %v1334
    %v1336 = vadd.f32 %v1335, 1.0
    %v1337 = vrcp.pop %v1336
    %v1338 = vmul.f32 1.0, %v1337
    %v1339 = vxor.u32 %v1330, 2147483648
    %v1340 = vmul.f32 %v1339, 1.442695
    %v1341 = vpow.pop %v1340
    %v1342 = vadd.f32 %v1341, 1.0
    %v1343 = vrcp.pop %v1342
    %v1344 = vmul.f32 1.0, %v1343
    %v1345 = vtanh.pop %v1331
    %v1346 = vxor.u32 %v1332, 2147483648
    %v1347 = vmul.f32 %v1346, 1.442695
    %v1348 = vpow.pop %v1347
    %v1349 = vadd.f32 %v1348, 1.0
    %v1350 = vrcp.pop %v1349
    %v1351 = vmul.f32 1.0, %v1350
    %v1352 = vmul.f32 %v1344, %v1179
    %v1353 = vmul.f32 %v1338, %v1345
    %v1354 = vadd.f32 %v1352, %v1353
    %v1355 = vtanh.pop %v1354
    %v1356 = vmul.f32 %v1351, %v1355
    %s1357 = scalar_lea.vmem [#allocation2], 160
    %v1358 = vld [vmem:[%s1357] sm:$0xff]
    %v1359 = vld [vmem:[%s1357 + $0x8] sm:$0xff]
    %v1360 = vld [vmem:[%s1357 + $0x10] sm:$0xff]
    %v1361 = vld [vmem:[%s1357 + $0x18] sm:$0xff]
    %1362 = vmatprep.subr.mxu0 %v418
    %1363 = vmatpush1.msra.mxu0 %v417
    %1364 = vmatprep.subr.mxu0 %v422
    %1365 = vmatpush1.msra.mxu0 %v421
    %1366 = vmatprep.subr.mxu0 %v426
    %1367 = vmatpush1.msra.mxu0 %v425
    %1368 = vmatprep.subr.mxu0 %v430
    %1369 = vmatpush1.msra.mxu0 %v429
    %1370 = vmatprep.subr.mxu0 %v434
    %1371 = vmatpush1.msra.mxu0 %v433
    %1372 = vmatprep.subr.mxu0 %v438
    %1373 = vmatpush1.msra.mxu0 %v437
    %1374 = vmatprep.subr.mxu0 %v442
    %1375 = vmatpush1.msra.mxu0 %v441
    %1376 = vmatprep.subr.mxu0 %v446
    %1377 = vmatpush1.msra.mxu0 %v445
    %1378 = vmatprep.subr.mxu0 %v450
    %1379 = vmatpush1.msra.mxu0 %v449
    %1380 = vmatprep.subr.mxu0 %v454
    %1381 = vmatpush1.msra.mxu0 %v453
    %1382 = vmatprep.subr.mxu0 %v458
    %1383 = vmatpush1.msra.mxu0 %v457
    %1384 = vmatprep.subr.mxu0 %v462
    %1385 = vmatpush1.msra.mxu0 %v461
    %1386 = vmatprep.subr.mxu0 %v466
    %1387 = vmatpush1.msra.mxu0 %v465
    %1388 = vmatprep.subr.mxu0 %v470
    %1389 = vmatpush1.msra.mxu0 %v469
    %1390 = vmatprep.subr.mxu0 %v474
    %1391 = vmatpush1.msra.mxu0 %v473
    %1392 = vmatprep.subr.mxu0 %v478
    %1393 = vmatpush1.msra.mxu0 %v477
    %1394 = vmatprep.subr.mxu0 0.0
    %1395 = vmatpush1.msra.mxu0 0.0
    %1396 = vmatprep.subr.mxu0 0.0
    %1397 = vmatpush1.msra.mxu0 0.0
    %1398 = vmatprep.subr.mxu0 0.0
    %1399 = vmatpush1.msra.mxu0 0.0
    %1400 = vmatprep.subr.mxu0 0.0
    %1401 = vmatpush1.msra.mxu0 0.0
    %1402 = vmatprep.subr.mxu0 0.0
    %1403 = vmatpush1.msra.mxu0 0.0
    %1404 = vmatprep.subr.mxu0 0.0
    %1405 = vmatpush1.msra.mxu0 0.0
    %1406 = vmatprep.subr.mxu0 0.0
    %1407 = vmatpush1.msra.mxu0 0.0
    %1408 = vmatprep.subr.mxu0 0.0
    %1409 = vmatpush1.msra.mxu0 0.0
    %1410 = vmatprep.subr.mxu0 0.0
    %1411 = vmatpush1.msra.mxu0 0.0
    %1412 = vmatprep.subr.mxu0 0.0
    %1413 = vmatpush1.msra.mxu0 0.0
    %1414 = vmatprep.subr.mxu0 0.0
    %1415 = vmatpush1.msra.mxu0 0.0
    %1416 = vmatprep.subr.mxu0 0.0
    %1417 = vmatpush1.msra.mxu0 0.0
    %1418 = vmatprep.subr.mxu0 0.0
    %1419 = vmatpush1.msra.mxu0 0.0
    %1420 = vmatprep.subr.mxu0 0.0
    %1421 = vmatpush1.msra.mxu0 0.0
    %1422 = vmatprep.subr.mxu0 0.0
    %1423 = vmatpush1.msra.mxu0 0.0
    %1424 = vmatprep.subr.mxu0 0.0
    %1425 = vmatpush1.msra.mxu0 0.0
    %1426 = vmatprep.mubr.f32.mxu0 0.0
    %1427 = vmatmul.mubr.f32.gmra.mrb[0].mxu0 %v1356
    %v1428 = vpop.f32.mrb[0].mxu0
    %v1429 = vadd.f32 0.0, %v1428
    %v1430 = vpop.f32.mrb[0].mxu0
    %v1431 = vadd.f32 0.0, %v1430
    %1432 = vdwg.mxu0
    %1433 = vmatprep.subr.mxu0 %v420
    %1434 = vmatpush1.msra.mxu0 %v419
    %1435 = vmatprep.subr.mxu0 %v424
    %1436 = vmatpush1.msra.mxu0 %v423
    %1437 = vmatprep.subr.mxu0 %v428
    %1438 = vmatpush1.msra.mxu0 %v427
    %1439 = vmatprep.subr.mxu0 %v432
    %1440 = vmatpush1.msra.mxu0 %v431
    %1441 = vmatprep.subr.mxu0 %v436
    %1442 = vmatpush1.msra.mxu0 %v435
    %1443 = vmatprep.subr.mxu0 %v440
    %1444 = vmatpush1.msra.mxu0 %v439
    %1445 = vmatprep.subr.mxu0 %v444
    %1446 = vmatpush1.msra.mxu0 %v443
    %1447 = vmatprep.subr.mxu0 %v448
    %1448 = vmatpush1.msra.mxu0 %v447
    %1449 = vmatprep.subr.mxu0 %v452
    %1450 = vmatpush1.msra.mxu0 %v451
    %1451 = vmatprep.subr.mxu0 %v456
    %1452 = vmatpush1.msra.mxu0 %v455
    %1453 = vmatprep.subr.mxu0 %v460
    %1454 = vmatpush1.msra.mxu0 %v459
    %1455 = vmatprep.subr.mxu0 %v464
    %1456 = vmatpush1.msra.mxu0 %v463
    %1457 = vmatprep.subr.mxu0 %v468
    %1458 = vmatpush1.msra.mxu0 %v467
    %1459 = vmatprep.subr.mxu0 %v472
    %1460 = vmatpush1.msra.mxu0 %v471
    %1461 = vmatprep.subr.mxu0 %v476
    %1462 = vmatpush1.msra.mxu0 %v475
    %1463 = vmatprep.subr.mxu0 %v480
    %1464 = vmatpush1.msra.mxu0 %v479
    %1465 = vmatprep.subr.mxu0 0.0
    %1466 = vmatpush1.msra.mxu0 0.0
    %1467 = vmatprep.subr.mxu0 0.0
    %1468 = vmatpush1.msra.mxu0 0.0
    %1469 = vmatprep.subr.mxu0 0.0
    %1470 = vmatpush1.msra.mxu0 0.0
    %1471 = vmatprep.subr.mxu0 0.0
    %1472 = vmatpush1.msra.mxu0 0.0
    %1473 = vmatprep.subr.mxu0 0.0
    %1474 = vmatpush1.msra.mxu0 0.0
    %1475 = vmatprep.subr.mxu0 0.0
    %1476 = vmatpush1.msra.mxu0 0.0
    %1477 = vmatprep.subr.mxu0 0.0
    %1478 = vmatpush1.msra.mxu0 0.0
    %1479 = vmatprep.subr.mxu0 0.0
    %1480 = vmatpush1.msra.mxu0 0.0
    %1481 = vmatprep.subr.mxu0 0.0
    %1482 = vmatpush1.msra.mxu0 0.0
    %1483 = vmatprep.subr.mxu0 0.0
    %1484 = vmatpush1.msra.mxu0 0.0
    %1485 = vmatprep.subr.mxu0 0.0
    %1486 = vmatpush1.msra.mxu0 0.0
    %1487 = vmatprep.subr.mxu0 0.0
    %1488 = vmatpush1.msra.mxu0 0.0
    %1489 = vmatprep.subr.mxu0 0.0
    %1490 = vmatpush1.msra.mxu0 0.0
    %1491 = vmatprep.subr.mxu0 0.0
    %1492 = vmatpush1.msra.mxu0 0.0
    %1493 = vmatprep.subr.mxu0 0.0
    %1494 = vmatpush1.msra.mxu0 0.0
    %1495 = vmatprep.subr.mxu0 0.0
    %1496 = vmatpush1.msra.mxu0 0.0
    %1497 = vmatprep.mubr.f32.mxu0 0.0
    %1498 = vmatmul.mubr.f32.gmra.mrb[0].mxu0 %v1356
    %v1499 = vpop.f32.mrb[0].mxu0
    %v1500 = vadd.f32 0.0, %v1499
    %v1501 = vpop.f32.mrb[0].mxu0
    %v1502 = vadd.f32 0.0, %v1501
    %1503 = vdwg.mxu0
    %v1504 = vadd.f32 %v1358, %v1429
    %v1505 = vadd.f32 %v1359, %v1431
    %v1506 = vadd.f32 %v1360, %v1500
    %v1507 = vadd.f32 %v1361, %v1502
    %v1508 = vxor.u32 %v1504, 2147483648
    %v1509 = vmul.f32 %v1508, 1.442695
    %v1510 = vpow.pop %v1509
    %v1511 = vadd.f32 %v1510, 1.0
    %v1512 = vrcp.pop %v1511
    %v1513 = vmul.f32 1.0, %v1512
    %v1514 = vxor.u32 %v1505, 2147483648
    %v1515 = vmul.f32 %v1514, 1.442695
    %v1516 = vpow.pop %v1515
    %v1517 = vadd.f32 %v1516, 1.0
    %v1518 = vrcp.pop %v1517
    %v1519 = vmul.f32 1.0, %v1518
    %v1520 = vtanh.pop %v1506
    %v1521 = vxor.u32 %v1507, 2147483648
    %v1522 = vmul.f32 %v1521, 1.442695
    %v1523 = vpow.pop %v1522
    %v1524 = vadd.f32 %v1523, 1.0
    %v1525 = vrcp.pop %v1524
    %v1526 = vmul.f32 1.0, %v1525
    %v1527 = vmul.f32 %v1519, %v1354
    %v1528 = vmul.f32 %v1513, %v1520
    %v1529 = vadd.f32 %v1527, %v1528
    %v1530 = vtanh.pop %v1529
    %v1531 = vmul.f32 %v1526, %v1530
    %s1532 = scalar_lea.vmem [#allocation2], 192
    %v1533 = vld [vmem:[%s1532] sm:$0xff]
    %v1534 = vld [vmem:[%s1532 + $0x8] sm:$0xff]
    %v1535 = vld [vmem:[%s1532 + $0x10] sm:$0xff]
    %v1536 = vld [vmem:[%s1532 + $0x18] sm:$0xff]
    %1537 = vmatprep.subr.mxu0 %v418
    %1538 = vmatpush1.msra.mxu0 %v417
    %1539 = vmatprep.subr.mxu0 %v422
    %1540 = vmatpush1.msra.mxu0 %v421
    %1541 = vmatprep.subr.mxu0 %v426
    %1542 = vmatpush1.msra.mxu0 %v425
    %1543 = vmatprep.subr.mxu0 %v430
    %1544 = vmatpush1.msra.mxu0 %v429
    %1545 = vmatprep.subr.mxu0 %v434
    %1546 = vmatpush1.msra.mxu0 %v433
    %1547 = vmatprep.subr.mxu0 %v438
    %1548 = vmatpush1.msra.mxu0 %v437
    %1549 = vmatprep.subr.mxu0 %v442
    %1550 = vmatpush1.msra.mxu0 %v441
    %1551 = vmatprep.subr.mxu0 %v446
    %1552 = vmatpush1.msra.mxu0 %v445
    %1553 = vmatprep.subr.mxu0 %v450
    %1554 = vmatpush1.msra.mxu0 %v449
    %1555 = vmatprep.subr.mxu0 %v454
    %1556 = vmatpush1.msra.mxu0 %v453
    %1557 = vmatprep.subr.mxu0 %v458
    %1558 = vmatpush1.msra.mxu0 %v457
    %1559 = vmatprep.subr.mxu0 %v462
    %1560 = vmatpush1.msra.mxu0 %v461
    %1561 = vmatprep.subr.mxu0 %v466
    %1562 = vmatpush1.msra.mxu0 %v465
    %1563 = vmatprep.subr.mxu0 %v470
    %1564 = vmatpush1.msra.mxu0 %v469
    %1565 = vmatprep.subr.mxu0 %v474
    %1566 = vmatpush1.msra.mxu0 %v473
    %1567 = vmatprep.subr.mxu0 %v478
    %1568 = vmatpush1.msra.mxu0 %v477
    %1569 = vmatprep.subr.mxu0 0.0
    %1570 = vmatpush1.msra.mxu0 0.0
    %1571 = vmatprep.subr.mxu0 0.0
    %1572 = vmatpush1.msra.mxu0 0.0
    %1573 = vmatprep.subr.mxu0 0.0
    %1574 = vmatpush1.msra.mxu0 0.0
    %1575 = vmatprep.subr.mxu0 0.0
    %1576 = vmatpush1.msra.mxu0 0.0
    %1577 = vmatprep.subr.mxu0 0.0
    %1578 = vmatpush1.msra.mxu0 0.0
    %1579 = vmatprep.subr.mxu0 0.0
    %1580 = vmatpush1.msra.mxu0 0.0
    %1581 = vmatprep.subr.mxu0 0.0
    %1582 = vmatpush1.msra.mxu0 0.0
    %1583 = vmatprep.subr.mxu0 0.0
    %1584 = vmatpush1.msra.mxu0 0.0
    %1585 = vmatprep.subr.mxu0 0.0
    %1586 = vmatpush1.msra.mxu0 0.0
    %1587 = vmatprep.subr.mxu0 0.0
    %1588 = vmatpush1.msra.mxu0 0.0
    %1589 = vmatprep.subr.mxu0 0.0
    %1590 = vmatpush1.msra.mxu0 0.0
    %1591 = vmatprep.subr.mxu0 0.0
    %1592 = vmatpush1.msra.mxu0 0.0
    %1593 = vmatprep.subr.mxu0 0.0
    %1594 = vmatpush1.msra.mxu0 0.0
    %1595 = vmatprep.subr.mxu0 0.0
    %1596 = vmatpush1.msra.mxu0 0.0
    %1597 = vmatprep.subr.mxu0 0.0
    %1598 = vmatpush1.msra.mxu0 0.0
    %1599 = vmatprep.subr.mxu0 0.0
    %1600 = vmatpush1.msra.mxu0 0.0
    %1601 = vmatprep.mubr.f32.mxu0 0.0
    %1602 = vmatmul.mubr.f32.gmra.mrb[0].mxu0 %v1531
    %v1603 = vpop.f32.mrb[0].mxu0
    %v1604 = vadd.f32 0.0, %v1603
    %v1605 = vpop.f32.mrb[0].mxu0
    %v1606 = vadd.f32 0.0, %v1605
    %1607 = vdwg.mxu0
    %1608 = vmatprep.subr.mxu0 %v420
    %1609 = vmatpush1.msra.mxu0 %v419
    %1610 = vmatprep.subr.mxu0 %v424
    %1611 = vmatpush1.msra.mxu0 %v423
    %1612 = vmatprep.subr.mxu0 %v428
    %1613 = vmatpush1.msra.mxu0 %v427
    %1614 = vmatprep.subr.mxu0 %v432
    %1615 = vmatpush1.msra.mxu0 %v431
    %1616 = vmatprep.subr.mxu0 %v436
    %1617 = vmatpush1.msra.mxu0 %v435
    %1618 = vmatprep.subr.mxu0 %v440
    %1619 = vmatpush1.msra.mxu0 %v439
    %1620 = vmatprep.subr.mxu0 %v444
    %1621 = vmatpush1.msra.mxu0 %v443
    %1622 = vmatprep.subr.mxu0 %v448
    %1623 = vmatpush1.msra.mxu0 %v447
    %1624 = vmatprep.subr.mxu0 %v452
    %1625 = vmatpush1.msra.mxu0 %v451
    %1626 = vmatprep.subr.mxu0 %v456
    %1627 = vmatpush1.msra.mxu0 %v455
    %1628 = vmatprep.subr.mxu0 %v460
    %1629 = vmatpush1.msra.mxu0 %v459
    %1630 = vmatprep.subr.mxu0 %v464
    %1631 = vmatpush1.msra.mxu0 %v463
    %1632 = vmatprep.subr.mxu0 %v468
    %1633 = vmatpush1.msra.mxu0 %v467
    %1634 = vmatprep.subr.mxu0 %v472
    %1635 = vmatpush1.msra.mxu0 %v471
    %1636 = vmatprep.subr.mxu0 %v476
    %1637 = vmatpush1.msra.mxu0 %v475
    %1638 = vmatprep.subr.mxu0 %v480
    %1639 = vmatpush1.msra.mxu0 %v479
    %1640 = vmatprep.subr.mxu0 0.0
    %1641 = vmatpush1.msra.mxu0 0.0
    %1642 = vmatprep.subr.mxu0 0.0
    %1643 = vmatpush1.msra.mxu0 0.0
    %1644 = vmatprep.subr.mxu0 0.0
    %1645 = vmatpush1.msra.mxu0 0.0
    %1646 = vmatprep.subr.mxu0 0.0
    %1647 = vmatpush1.msra.mxu0 0.0
    %1648 = vmatprep.subr.mxu0 0.0
    %1649 = vmatpush1.msra.mxu0 0.0
    %1650 = vmatprep.subr.mxu0 0.0
    %1651 = vmatpush1.msra.mxu0 0.0
    %1652 = vmatprep.subr.mxu0 0.0
    %1653 = vmatpush1.msra.mxu0 0.0
    %1654 = vmatprep.subr.mxu0 0.0
    %1655 = vmatpush1.msra.mxu0 0.0
    %1656 = vmatprep.subr.mxu0 0.0
    %1657 = vmatpush1.msra.mxu0 0.0
    %1658 = vmatprep.subr.mxu0 0.0
    %1659 = vmatpush1.msra.mxu0 0.0
    %1660 = vmatprep.subr.mxu0 0.0
    %1661 = vmatpush1.msra.mxu0 0.0
    %1662 = vmatprep.subr.mxu0 0.0
    %1663 = vmatpush1.msra.mxu0 0.0
    %1664 = vmatprep.subr.mxu0 0.0
    %1665 = vmatpush1.msra.mxu0 0.0
    %1666 = vmatprep.subr.mxu0 0.0
    %1667 = vmatpush1.msra.mxu0 0.0
    %1668 = vmatprep.subr.mxu0 0.0
    %1669 = vmatpush1.msra.mxu0 0.0
    %1670 = vmatprep.subr.mxu0 0.0
    %1671 = vmatpush1.msra.mxu0 0.0
    %1672 = vmatprep.mubr.f32.mxu0 0.0
    %1673 = vmatmul.mubr.f32.gmra.mrb[0].mxu0 %v1531
    %v1674 = vpop.f32.mrb[0].mxu0
    %v1675 = vadd.f32 0.0, %v1674
    %v1676 = vpop.f32.mrb[0].mxu0
    %v1677 = vadd.f32 0.0, %v1676
    %1678 = vdwg.mxu0
    %v1679 = vadd.f32 %v1533, %v1604
    %v1680 = vadd.f32 %v1534, %v1606
    %v1681 = vadd.f32 %v1535, %v1675
    %v1682 = vadd.f32 %v1536, %v1677
    %v1683 = vxor.u32 %v1679, 2147483648
    %v1684 = vmul.f32 %v1683, 1.442695
    %v1685 = vpow.pop %v1684
    %v1686 = vadd.f32 %v1685, 1.0
    %v1687 = vrcp.pop %v1686
    %v1688 = vmul.f32 1.0, %v1687
    %v1689 = vxor.u32 %v1680, 2147483648
    %v1690 = vmul.f32 %v1689, 1.442695
    %v1691 = vpow.pop %v1690
    %v1692 = vadd.f32 %v1691, 1.0
    %v1693 = vrcp.pop %v1692
    %v1694 = vmul.f32 1.0, %v1693
    %v1695 = vtanh.pop %v1681
    %v1696 = vxor.u32 %v1682, 2147483648
    %v1697 = vmul.f32 %v1696, 1.442695
    %v1698 = vpow.pop %v1697
    %v1699 = vadd.f32 %v1698, 1.0
    %v1700 = vrcp.pop %v1699
    %v1701 = vmul.f32 1.0, %v1700
    %v1702 = vmul.f32 %v1694, %v1529
    %v1703 = vmul.f32 %v1688, %v1695
    %v1704 = vadd.f32 %v1702, %v1703
    %v1705 = vtanh.pop %v1704
    %v1706 = vmul.f32 %v1701, %v1705
    %s1707 = scalar_lea.vmem [#allocation2], 224
    %v1708 = vld [vmem:[%s1707] sm:$0xff]
    %v1709 = vld [vmem:[%s1707 + $0x8] sm:$0xff]
    %v1710 = vld [vmem:[%s1707 + $0x10] sm:$0xff]
    %v1711 = vld [vmem:[%s1707 + $0x18] sm:$0xff]
    %1712 = vmatprep.subr.mxu0 %v418
    %1713 = vmatpush1.msra.mxu0 %v417
    %1714 = vmatprep.subr.mxu0 %v422
    %1715 = vmatpush1.msra.mxu0 %v421
    %1716 = vmatprep.subr.mxu0 %v426
    %1717 = vmatpush1.msra.mxu0 %v425
    %1718 = vmatprep.subr.mxu0 %v430
    %1719 = vmatpush1.msra.mxu0 %v429
    %1720 = vmatprep.subr.mxu0 %v434
    %1721 = vmatpush1.msra.mxu0 %v433
    %1722 = vmatprep.subr.mxu0 %v438
    %1723 = vmatpush1.msra.mxu0 %v437
    %1724 = vmatprep.subr.mxu0 %v442
    %1725 = vmatpush1.msra.mxu0 %v441
    %1726 = vmatprep.subr.mxu0 %v446
    %1727 = vmatpush1.msra.mxu0 %v445
    %1728 = vmatprep.subr.mxu0 %v450
    %1729 = vmatpush1.msra.mxu0 %v449
    %1730 = vmatprep.subr.mxu0 %v454
    %1731 = vmatpush1.msra.mxu0 %v453
    %1732 = vmatprep.subr.mxu0 %v458
    %1733 = vmatpush1.msra.mxu0 %v457
    %1734 = vmatprep.subr.mxu0 %v462
    %1735 = vmatpush1.msra.mxu0 %v461
    %1736 = vmatprep.subr.mxu0 %v466
    %1737 = vmatpush1.msra.mxu0 %v465
    %1738 = vmatprep.subr.mxu0 %v470
    %1739 = vmatpush1.msra.mxu0 %v469
    %1740 = vmatprep.subr.mxu0 %v474
    %1741 = vmatpush1.msra.mxu0 %v473
    %1742 = vmatprep.subr.mxu0 %v478
    %1743 = vmatpush1.msra.mxu0 %v477
    %1744 = vmatprep.subr.mxu0 0.0
    %1745 = vmatpush1.msra.mxu0 0.0
    %1746 = vmatprep.subr.mxu0 0.0
    %1747 = vmatpush1.msra.mxu0 0.0
    %1748 = vmatprep.subr.mxu0 0.0
    %1749 = vmatpush1.msra.mxu0 0.0
    %1750 = vmatprep.subr.mxu0 0.0
    %1751 = vmatpush1.msra.mxu0 0.0
    %1752 = vmatprep.subr.mxu0 0.0
    %1753 = vmatpush1.msra.mxu0 0.0
    %1754 = vmatprep.subr.mxu0 0.0
    %1755 = vmatpush1.msra.mxu0 0.0
    %1756 = vmatprep.subr.mxu0 0.0
    %1757 = vmatpush1.msra.mxu0 0.0
    %1758 = vmatprep.subr.mxu0 0.0
    %1759 = vmatpush1.msra.mxu0 0.0
    %1760 = vmatprep.subr.mxu0 0.0
    %1761 = vmatpush1.msra.mxu0 0.0
    %1762 = vmatprep.subr.mxu0 0.0
    %1763 = vmatpush1.msra.mxu0 0.0
    %1764 = vmatprep.subr.mxu0 0.0
    %1765 = vmatpush1.msra.mxu0 0.0
    %1766 = vmatprep.subr.mxu0 0.0
    %1767 = vmatpush1.msra.mxu0 0.0
    %1768 = vmatprep.subr.mxu0 0.0
    %1769 = vmatpush1.msra.mxu0 0.0
    %1770 = vmatprep.subr.mxu0 0.0
    %1771 = vmatpush1.msra.mxu0 0.0
    %1772 = vmatprep.subr.mxu0 0.0
    %1773 = vmatpush1.msra.mxu0 0.0
    %1774 = vmatprep.subr.mxu0 0.0
    %1775 = vmatpush1.msra.mxu0 0.0
    %1776 = vmatprep.mubr.f32.mxu0 0.0
    %1777 = vmatmul.mubr.f32.gmra.mrb[0].mxu0 %v1706
    %v1778 = vpop.f32.mrb[0].mxu0
    %v1779 = vadd.f32 0.0, %v1778
    %v1780 = vpop.f32.mrb[0].mxu0
    %v1781 = vadd.f32 0.0, %v1780
    %1782 = vdwg.mxu0
    %1783 = vmatprep.subr.mxu0 %v420
    %1784 = vmatpush1.msra.mxu0 %v419
    %1785 = vmatprep.subr.mxu0 %v424
    %1786 = vmatpush1.msra.mxu0 %v423
    %1787 = vmatprep.subr.mxu0 %v428
    %1788 = vmatpush1.msra.mxu0 %v427
    %1789 = vmatprep.subr.mxu0 %v432
    %1790 = vmatpush1.msra.mxu0 %v431
    %1791 = vmatprep.subr.mxu0 %v436
    %1792 = vmatpush1.msra.mxu0 %v435
    %1793 = vmatprep.subr.mxu0 %v440
    %1794 = vmatpush1.msra.mxu0 %v439
    %1795 = vmatprep.subr.mxu0 %v444
    %1796 = vmatpush1.msra.mxu0 %v443
    %1797 = vmatprep.subr.mxu0 %v448
    %1798 = vmatpush1.msra.mxu0 %v447
    %1799 = vmatprep.subr.mxu0 %v452
    %1800 = vmatpush1.msra.mxu0 %v451
    %1801 = vmatprep.subr.mxu0 %v456
    %1802 = vmatpush1.msra.mxu0 %v455
    %1803 = vmatprep.subr.mxu0 %v460
    %1804 = vmatpush1.msra.mxu0 %v459
    %1805 = vmatprep.subr.mxu0 %v464
    %1806 = vmatpush1.msra.mxu0 %v463
    %1807 = vmatprep.subr.mxu0 %v468
    %1808 = vmatpush1.msra.mxu0 %v467
    %1809 = vmatprep.subr.mxu0 %v472
    %1810 = vmatpush1.msra.mxu0 %v471
    %1811 = vmatprep.subr.mxu0 %v476
    %1812 = vmatpush1.msra.mxu0 %v475
    %1813 = vmatprep.subr.mxu0 %v480
    %1814 = vmatpush1.msra.mxu0 %v479
    %1815 = vmatprep.subr.mxu0 0.0
    %1816 = vmatpush1.msra.mxu0 0.0
    %1817 = vmatprep.subr.mxu0 0.0
    %1818 = vmatpush1.msra.mxu0 0.0
    %1819 = vmatprep.subr.mxu0 0.0
    %1820 = vmatpush1.msra.mxu0 0.0
    %1821 = vmatprep.subr.mxu0 0.0
    %1822 = vmatpush1.msra.mxu0 0.0
    %1823 = vmatprep.subr.mxu0 0.0
    %1824 = vmatpush1.msra.mxu0 0.0
    %1825 = vmatprep.subr.mxu0 0.0
    %1826 = vmatpush1.msra.mxu0 0.0
    %1827 = vmatprep.subr.mxu0 0.0
    %1828 = vmatpush1.msra.mxu0 0.0
    %1829 = vmatprep.subr.mxu0 0.0
    %1830 = vmatpush1.msra.mxu0 0.0
    %1831 = vmatprep.subr.mxu0 0.0
    %1832 = vmatpush1.msra.mxu0 0.0
    %1833 = vmatprep.subr.mxu0 0.0
    %1834 = vmatpush1.msra.mxu0 0.0
    %1835 = vmatprep.subr.mxu0 0.0
    %1836 = vmatpush1.msra.mxu0 0.0
    %1837 = vmatprep.subr.mxu0 0.0
    %1838 = vmatpush1.msra.mxu0 0.0
    %1839 = vmatprep.subr.mxu0 0.0
    %1840 = vmatpush1.msra.mxu0 0.0
    %1841 = vmatprep.subr.mxu0 0.0
    %1842 = vmatpush1.msra.mxu0 0.0
    %1843 = vmatprep.subr.mxu0 0.0
    %1844 = vmatpush1.msra.mxu0 0.0
    %1845 = vmatprep.subr.mxu0 0.0
    %1846 = vmatpush1.msra.mxu0 0.0
    %1847 = vmatprep.mubr.f32.mxu0 0.0
    %1848 = vmatmul.mubr.f32.gmra.mrb[0].mxu0 %v1706
    %v1849 = vpop.f32.mrb[0].mxu0
    %v1850 = vadd.f32 0.0, %v1849
    %v1851 = vpop.f32.mrb[0].mxu0
    %v1852 = vadd.f32 0.0, %v1851
    %1853 = vdwg.mxu0
    %v1854 = vadd.f32 %v1708, %v1779
    %v1855 = vadd.f32 %v1709, %v1781
    %v1856 = vadd.f32 %v1710, %v1850
    %v1857 = vadd.f32 %v1711, %v1852
    %v1858 = vxor.u32 %v1854, 2147483648
    %v1859 = vmul.f32 %v1858, 1.442695
    %v1860 = vpow.pop %v1859
    %v1861 = vadd.f32 %v1860, 1.0
    %v1862 = vrcp.pop %v1861
    %v1863 = vmul.f32 1.0, %v1862
    %v1864 = vxor.u32 %v1855, 2147483648
    %v1865 = vmul.f32 %v1864, 1.442695
    %v1866 = vpow.pop %v1865
    %v1867 = vadd.f32 %v1866, 1.0
    %v1868 = vrcp.pop %v1867
    %v1869 = vmul.f32 1.0, %v1868
    %v1870 = vtanh.pop %v1856
    %v1871 = vxor.u32 %v1857, 2147483648
    %v1872 = vmul.f32 %v1871, 1.442695
    %v1873 = vpow.pop %v1872
    %v1874 = vadd.f32 %v1873, 1.0
    %v1875 = vrcp.pop %v1874
    %v1876 = vmul.f32 1.0, %v1875
    %v1877 = vmul.f32 %v1869, %v1704
    %v1878 = vmul.f32 %v1863, %v1870
    %v1879 = vadd.f32 %v1877, %v1878
    %v1880 = vtanh.pop %v1879
    %v1881 = vmul.f32 %v1876, %v1880
    %1882 = vst [vmem:[#allocation3] sm:$0xff] %v1881
    %1883 = vst [vmem:[#allocation4] sm:$0xff] %v1879
    // Predicated region
    $region34: #{tpu_custom_call.1} parent=1 // pred_check
      %p1884 = pneg %p59
    $region35: #{tpu_custom_call.1} parent=1 // pred_check_branch
      %1886 = sbr.rel (%p1884) target = $region37
    $region36: #{tpu_custom_call.1} parent=1 // pred_region
      %v1887 = vld [vmem:[#allocation3] sm:$0xff]
      %1888 = vst [vmem:[#allocation11] sm:$0xff] %v1887
    $region37: #{tpu_custom_call.1} parent=1 // pred_fallthru
      _
    // Predicated region
    $region38: #{tpu_custom_call.1} parent=1 // pred_check
      _
    $region39: #{tpu_custom_call.1} parent=1 // pred_check_branch
      %1890 = sbr.rel (0) target = $region41
    $region40: #{tpu_custom_call.1} parent=1 // pred_region
      %s1892 = ssub.s32 128, 128
      %1893 = vsyncadd [#allocation7], %s1892
      %s1895 = sshll.u32 [#allocation11], 4
      %s1896 = int_to_ptr.vmem [resolvable:$true] %s1895
      %1898 = dma.vmem_to_hbm [thread:$0]  %s1896, 128, %s4, [#allocation7]
    $region41: #{tpu_custom_call.1} parent=1 // pred_fallthru
      _
    // Predicated region
    $region42: #{tpu_custom_call.1} parent=1 // pred_check
      _
    $region43: #{tpu_custom_call.1} parent=1 // pred_check_branch
      %1900 = sbr.rel (0) target = $region45
    $region44: #{tpu_custom_call.1} parent=1 // pred_region
      %1901 = dma.done [#allocation7], 128
    $region45: #{tpu_custom_call.1} parent=1 // pred_fallthru
      _
    %1902 = vsyncpa [#allocation6], 1
    %1903 = vsyncpa [#allocation9], 1
    %1904 = vsyncpa [#allocation7], 1

</llo_original>
